<compile_context>
chip_gen: v7x
topology: tpu7x:2x2x1
jax: 0.10.0
libtpu: 0.0.40
codegen_flags: <defaults>
</compile_context>

<pallas_src>
import functools

import jax
import jax.numpy as jnp
from jax.experimental import pallas as pl
from jax.experimental.pallas import tpu as pltpu

LN_EPS = 1e-12          # HF BERT layer_norm_eps
NEG_MASK = -10000.0     # HF-style additive attention mask
VMEM_LIMIT = 64 * 1024 * 1024   # explicit scoped-VMEM limit, safe on v5e/v6e/v7x


# ----------------------------------------------------------------------------
# In-kernel helpers
# ----------------------------------------------------------------------------
def _layernorm(x, gamma, beta):
    mu = jnp.mean(x, axis=-1, keepdims=True)
    var = jnp.mean((x - mu) ** 2, axis=-1, keepdims=True)
    return (x - mu) * jax.lax.rsqrt(var + LN_EPS) * gamma + beta


# ----------------------------------------------------------------------------
# Kernel 1: attention half of a BERT layer (one batch element per grid step)
# ----------------------------------------------------------------------------
def attn_layer_kernel(x_ref, mask_ref, ilng_ref, ilnb_ref,
                      wq_ref, bq_ref, wk_ref, bk_ref, wv_ref, bv_ref,
                      wo_ref, bo_ref, ln1g_ref, ln1b_ref,
                      o_ref, *, num_heads, apply_input_ln):
    x = x_ref[...].astype(jnp.float32)                       # (S, H) — f32 math
    if apply_input_ln:                                       # fused embedding LayerNorm
        x = _layernorm(x, ilng_ref[...], ilnb_ref[...])
    S, H = x.shape
    dh = H // num_heads
    scale = 1.0 / float(dh) ** 0.5

    # --- QKV projections: bf16 operands feed the MXU, f32 accumulation ---
    xb = x.astype(jnp.bfloat16)
    q = jnp.dot(xb, wq_ref[...], preferred_element_type=jnp.float32) + bq_ref[...]
    k = jnp.dot(xb, wk_ref[...], preferred_element_type=jnp.float32) + bk_ref[...]
    v = jnp.dot(xb, wv_ref[...], preferred_element_type=jnp.float32) + bv_ref[...]
    q = q * jnp.float32(scale)            # fold 1/sqrt(dh) into q (S,H), not into (S,S) scores

    # --- head-batched attention: (num_heads, S, dh) ---
    q3 = q.reshape(S, num_heads, dh).transpose(1, 0, 2).astype(jnp.bfloat16)
    k3 = k.reshape(S, num_heads, dh).transpose(1, 0, 2).astype(jnp.bfloat16)
    v3 = v.reshape(S, num_heads, dh).transpose(1, 0, 2).astype(jnp.bfloat16)

    s = jnp.einsum("hqd,hkd->hqk", q3, k3,
                   preferred_element_type=jnp.float32)       # (H, S, S) f32 scores
    add_mask = (1.0 - mask_ref[...].astype(jnp.float32)) * jnp.float32(NEG_MASK)  # (1, S)
    s = s + add_mask[None, :, :]                             # broadcast heads & queries

    # softmax in f32; divide via approx reciprocal (EUP slot)
    s = s - jnp.max(s, axis=-1, keepdims=True)
    p = jnp.exp(s)
    p = p * pl.reciprocal(jnp.sum(p, axis=-1, keepdims=True), approx=True)

    ctx = jnp.einsum("hqk,hkd->hqd", p.astype(jnp.bfloat16), v3,
                     preferred_element_type=jnp.float32)     # (H, S, dh)
    ctx = ctx.transpose(1, 0, 2).reshape(S, H)

    attn_out = jnp.dot(ctx.astype(jnp.bfloat16), wo_ref[...],
                       preferred_element_type=jnp.float32) + bo_ref[...]
    o_ref[...] = _layernorm(x + attn_out, ln1g_ref[...], ln1b_ref[...]).astype(o_ref.dtype)


# ----------------------------------------------------------------------------
# Kernel 2: FFN half of a BERT layer, rows flattened over B*S, tiled over I
# ----------------------------------------------------------------------------
def ffn_layer_kernel(y_ref, w1_ref, b1_ref, w2_ref, b2_ref, ln2g_ref, ln2b_ref,
                     o_ref, acc_ref):
    j = pl.program_id(1)

    @pl.when(j == 0)
    def _():
        acc_ref[...] = jnp.zeros_like(acc_ref)

    y = y_ref[...].astype(jnp.float32)                       # (TM, H)
    h1 = jnp.dot(y.astype(jnp.bfloat16), w1_ref[...],
                 preferred_element_type=jnp.float32) + b1_ref[...]
    # TODO(synk): HF BERT uses exact erf-GELU; tanh approximation used here.
    h1 = jax.nn.gelu(h1, approximate=True)
    acc_ref[...] += jnp.dot(h1.astype(jnp.bfloat16), w2_ref[...],
                            preferred_element_type=jnp.float32)

    @pl.when(j == pl.num_programs(1) - 1)
    def _():
        out = y + acc_ref[...] + b2_ref[...]
        o_ref[...] = _layernorm(out, ln2g_ref[...], ln2b_ref[...]).astype(o_ref.dtype)


# ----------------------------------------------------------------------------
# Wrappers around pallas_call
# ----------------------------------------------------------------------------
def _pick_tile(n, candidates):
    for c in candidates:
        if c <= n and n % c == 0:
            return c
    return n


def attn_layer(x, attn_mask, lp, emb_ln, num_heads, apply_input_ln):
    B, S, H = x.shape
    mat = lambda r, c: pl.BlockSpec((r, c), lambda b: (0, 0))
    kernel = functools.partial(attn_layer_kernel, num_heads=num_heads,
                               apply_input_ln=apply_input_ln)
    return pl.pallas_call(
        kernel,
        out_shape=jax.ShapeDtypeStruct((B, S, H), x.dtype),
        grid=(B,),
        in_specs=[
            pl.BlockSpec((None, S, H), lambda b: (b, 0, 0)),   # x
            pl.BlockSpec((None, 1, S), lambda b: (b, 0, 0)),   # mask (B,1,S)
            mat(1, H), mat(1, H),   # embedding LN gamma/beta (used for layer 0 only)
            mat(H, H), mat(1, H),   # wq, bq
            mat(H, H), mat(1, H),   # wk, bk
            mat(H, H), mat(1, H),   # wv, bv
            mat(H, H), mat(1, H),   # wo, bo
            mat(1, H), mat(1, H),   # ln1 gamma/beta
        ],
        out_specs=pl.BlockSpec((None, S, H), lambda b: (b, 0, 0)),
        compiler_params=pltpu.CompilerParams(
            dimension_semantics=("parallel",),
            vmem_limit_bytes=VMEM_LIMIT),
    )(x, attn_mask, emb_ln[0], emb_ln[1],
      lp["wq"], lp["bq"], lp["wk"], lp["bk"], lp["wv"], lp["bv"],
      lp["wo"], lp["bo"], lp["ln1_g"], lp["ln1_b"])


def ffn_layer(y, lp):
    B, S, H = y.shape
    I = lp["w1"].shape[1]
    M = B * S
    y2 = y.reshape(M, H)                       # flatten batch into MXU M-dimension
    tm = _pick_tile(M, (256, 128, 64, 32, 16, 8))
    ti = _pick_tile(I, (512, 256, 128, 64, 32, 16, 8))
    out = pl.pallas_call(
        ffn_layer_kernel,
        out_shape=jax.ShapeDtypeStruct((M, H), y.dtype),
        grid=(M // tm, I // ti),
        in_specs=[
            pl.BlockSpec((tm, H), lambda i, j: (i, 0)),   # y rows
            pl.BlockSpec((H, ti), lambda i, j: (0, j)),   # w1 I-slab
            pl.BlockSpec((1, ti), lambda i, j: (0, j)),   # b1 I-slab
            pl.BlockSpec((ti, H), lambda i, j: (j, 0)),   # w2 I-slab
            pl.BlockSpec((1, H), lambda i, j: (0, 0)),    # b2
            pl.BlockSpec((1, H), lambda i, j: (0, 0)),    # ln2 gamma
            pl.BlockSpec((1, H), lambda i, j: (0, 0)),    # ln2 beta
        ],
        out_specs=pl.BlockSpec((tm, H), lambda i, j: (i, 0)),
        scratch_shapes=[pltpu.VMEM((tm, H), jnp.float32)],
        compiler_params=pltpu.CompilerParams(
            dimension_semantics=("parallel", "arbitrary"),
            vmem_limit_bytes=VMEM_LIMIT),
    )(y2, lp["w1"], lp["b1"], lp["w2"], lp["b2"], lp["ln2_g"], lp["ln2_b"])
    return out.reshape(B, S, H)


# ----------------------------------------------------------------------------
# Synthetic BERT-style encoder ("CustomEncoder.forward" equivalent)
# ----------------------------------------------------------------------------
def init_encoder_params(key, *, vocab, max_pos, type_vocab, hidden, inter, layers):
    keys = jax.random.split(key, 3 + layers * 6)

    def w(k, shape):   # weight matrices stored in bf16 (MXU-native, half the HBM/VMEM)
        return (jax.random.normal(k, shape, jnp.float32) * 0.02).astype(jnp.bfloat16)

    p = {
        "word_emb": jax.random.normal(keys[0], (vocab, hidden), jnp.float32) * 0.02,
        "pos_emb": jax.random.normal(keys[1], (max_pos, hidden), jnp.float32) * 0.02,
        "type_emb": jax.random.normal(keys[2], (type_vocab, hidden), jnp.float32) * 0.02,
        "emb_ln_g": jnp.ones((1, hidden), jnp.float32),
        "emb_ln_b": jnp.zeros((1, hidden), jnp.float32),
        "layers": [],
    }
    for l in range(layers):
        k = keys[3 + l * 6: 3 + (l + 1) * 6]
        lp = {
            "wq": w(k[0], (hidden, hidden)), "bq": jnp.zeros((1, hidden), jnp.float32),
            "wk": w(k[1], (hidden, hidden)), "bk": jnp.zeros((1, hidden), jnp.float32),
            "wv": w(k[2], (hidden, hidden)), "bv": jnp.zeros((1, hidden), jnp.float32),
            "wo": w(k[3], (hidden, hidden)), "bo": jnp.zeros((1, hidden), jnp.float32),
            "ln1_g": jnp.ones((1, hidden), jnp.float32),
            "ln1_b": jnp.zeros((1, hidden), jnp.float32),
            "w1": w(k[4], (hidden, inter)), "b1": jnp.zeros((1, inter), jnp.float32),
            "w2": w(k[5], (inter, hidden)), "b2": jnp.zeros((1, hidden), jnp.float32),
            "ln2_g": jnp.ones((1, hidden), jnp.float32),
            "ln2_b": jnp.zeros((1, hidden), jnp.float32),
        }
        p["layers"].append(lp)
    return p


def custom_encoder_forward(params, input_ids, attention_mask=None,
                           token_type_ids=None, *, num_heads):
    B, S = input_ids.shape
    H = params["word_emb"].shape[1]
    assert H % num_heads == 0, "hidden size must be divisible by num_heads"
    if attention_mask is None:
        attention_mask = jnp.ones((B, S), jnp.float32)
    if token_type_ids is None:
        token_type_ids = jnp.zeros((B, S), jnp.int32)

    # Embedding lookups (glue — data-dependent gathers stay in JAX).
    emb = (jnp.take(params["word_emb"], input_ids, axis=0)
           + params["pos_emb"][None, :S, :]
           + jnp.take(params["type_emb"], token_type_ids, axis=0))   # (B, S, H) f32

    mask = attention_mask.astype(jnp.float32).reshape(B, 1, S)
    emb_ln = (params["emb_ln_g"], params["emb_ln_b"])

    x = emb
    for li, lp in enumerate(params["layers"]):
        # embedding LayerNorm is fused into the first attention kernel
        x = attn_layer(x, mask, lp, emb_ln, num_heads, apply_input_ln=(li == 0))
        x = ffn_layer(x, lp)
    return x  # last_hidden_state: (B, S, H)


# ----------------------------------------------------------------------------
# Pure-JAX reference (mirrors the kernel's bf16-matmul / f32-accumulate scheme)
# ----------------------------------------------------------------------------
def reference_forward(params, input_ids, attention_mask, token_type_ids, num_heads):
    B, S = input_ids.shape
    H = params["word_emb"].shape[1]
    dh = H // num_heads
    bf16, f32 = jnp.bfloat16, jnp.float32

    def ln(v, g, b):
        mu = v.mean(-1, keepdims=True)
        var = ((v - mu) ** 2).mean(-1, keepdims=True)
        return (v - mu) * jax.lax.rsqrt(var + LN_EPS) * g + b

    def mm(a, b):
        return jnp.matmul(a.astype(bf16), b.astype(bf16), preferred_element_type=f32)

    x = (jnp.take(params["word_emb"], input_ids, axis=0)
         + params["pos_emb"][None, :S, :]
         + jnp.take(params["type_emb"], token_type_ids, axis=0))
    x = ln(x, params["emb_ln_g"], params["emb_ln_b"])
    add_mask = (1.0 - attention_mask.astype(f32))[:, None, None, :] * NEG_MASK
    for lp in params["layers"]:
        q = (mm(x, lp["wq"]) + lp["bq"]) * (1.0 / dh ** 0.5)
        k = mm(x, lp["wk"]) + lp["bk"]
        v = mm(x, lp["wv"]) + lp["bv"]
        q4 = q.astype(bf16).reshape(B, S, num_heads, dh)
        k4 = k.astype(bf16).reshape(B, S, num_heads, dh)
        v4 = v.astype(bf16).reshape(B, S, num_heads, dh)
        s = jnp.einsum("bqhd,bkhd->bhqk", q4, k4, preferred_element_type=f32) + add_mask
        p = jax.nn.softmax(s, axis=-1)
        ctx = jnp.einsum("bhqk,bkhd->bqhd", p.astype(bf16), v4,
                         preferred_element_type=f32).reshape(B, S, H)
        y = ln(x + mm(ctx, lp["wo"]) + lp["bo"], lp["ln1_g"], lp["ln1_b"])
        h1 = jax.nn.gelu(mm(y, lp["w1"]) + lp["b1"], approximate=True)
        x = ln(y + mm(h1, lp["w2"]) + lp["b2"], lp["ln2_g"], lp["ln2_b"])
    return x


# ----------------------------------------------------------------------------
if __name__ == "__main__":
    VOCAB, MAX_POS, TYPE_VOCAB = 100, 16, 2
    HIDDEN, INTER, LAYERS, HEADS = 32, 64, 2, 4
    B, S = 2, 8

    key = jax.random.PRNGKey(0)
    kp, kid = jax.random.split(key)
    params = init_encoder_params(kp, vocab=VOCAB, max_pos=MAX_POS,
                                 type_vocab=TYPE_VOCAB, hidden=HIDDEN,
                                 inter=INTER, layers=LAYERS)

    input_ids = jax.random.randint(kid, (B, S), 0, VOCAB, dtype=jnp.int32)
    attention_mask = jnp.array([[1, 1, 1, 1, 1, 1, 1, 1],
                                [1, 1, 1, 1, 1, 0, 0, 0]], jnp.float32)
    token_type_ids = jnp.zeros((B, S), jnp.int32)

    out = custom_encoder_forward(params, input_ids, attention_mask,
                                 token_type_ids, num_heads=HEADS)
    out = jax.block_until_ready(out)

    ref = reference_forward(params, input_ids, attention_mask,
                            token_type_ids, HEADS)
    assert out.shape == (B, S, HIDDEN)
    assert jnp.allclose(out, ref, atol=2e-2, rtol=2e-2), "mismatch vs reference"
    print("KERNEL_OK")
</pallas_src>

<mosaic_0001>
module attributes {stable_mosaic.version = 11 : i64} {
  func.func @attn_layer_kernel(%arg0: i32, %arg1: memref<1x8x32xf32, #tpu.memory_space<vmem>>, %arg2: memref<1x1x8xf32, #tpu.memory_space<vmem>>, %arg3: memref<1x32xf32, #tpu.memory_space<vmem>>, %arg4: memref<1x32xf32, #tpu.memory_space<vmem>>, %arg5: memref<32x32xbf16, #tpu.memory_space<vmem>>, %arg6: memref<1x32xf32, #tpu.memory_space<vmem>>, %arg7: memref<32x32xbf16, #tpu.memory_space<vmem>>, %arg8: memref<1x32xf32, #tpu.memory_space<vmem>>, %arg9: memref<32x32xbf16, #tpu.memory_space<vmem>>, %arg10: memref<1x32xf32, #tpu.memory_space<vmem>>, %arg11: memref<32x32xbf16, #tpu.memory_space<vmem>>, %arg12: memref<1x32xf32, #tpu.memory_space<vmem>>, %arg13: memref<1x32xf32, #tpu.memory_space<vmem>>, %arg14: memref<1x32xf32, #tpu.memory_space<vmem>>, %arg15: memref<1x8x32xf32, #tpu.memory_space<vmem>>) attributes {dimension_semantics = [#tpu.dimension_semantics<parallel>], iteration_bounds = array<i64: 2>, scalar_prefetch = 0 : i64, scratch_operands = 0 : i64, tpu.core_type = #tpu.core_type<tc>, window_params = [{transform_indices = @transform_0, window_bounds = array<i64: 1, 8, 32>}, {transform_indices = @transform_1, window_bounds = array<i64: 1, 1, 8>}, {pipeline_mode = #tpu.pipeline_mode<synchronous>, transform_indices = @transform_2, window_bounds = array<i64: 1, 32>}, {pipeline_mode = #tpu.pipeline_mode<synchronous>, transform_indices = @transform_3, window_bounds = array<i64: 1, 32>}, {pipeline_mode = #tpu.pipeline_mode<synchronous>, transform_indices = @transform_4, window_bounds = array<i64: 32, 32>}, {pipeline_mode = #tpu.pipeline_mode<synchronous>, transform_indices = @transform_5, window_bounds = array<i64: 1, 32>}, {pipeline_mode = #tpu.pipeline_mode<synchronous>, transform_indices = @transform_6, window_bounds = array<i64: 32, 32>}, {pipeline_mode = #tpu.pipeline_mode<synchronous>, transform_indices = @transform_7, window_bounds = array<i64: 1, 32>}, {pipeline_mode = #tpu.pipeline_mode<synchronous>, transform_indices = @transform_8, window_bounds = array<i64: 32, 32>}, {pipeline_mode = #tpu.pipeline_mode<synchronous>, transform_indices = @transform_9, window_bounds = array<i64: 1, 32>}, {pipeline_mode = #tpu.pipeline_mode<synchronous>, transform_indices = @transform_10, window_bounds = array<i64: 32, 32>}, {pipeline_mode = #tpu.pipeline_mode<synchronous>, transform_indices = @transform_11, window_bounds = array<i64: 1, 32>}, {pipeline_mode = #tpu.pipeline_mode<synchronous>, transform_indices = @transform_12, window_bounds = array<i64: 1, 32>}, {pipeline_mode = #tpu.pipeline_mode<synchronous>, transform_indices = @transform_13, window_bounds = array<i64: 1, 32>}, {transform_indices = @transform_14, window_bounds = array<i64: 1, 8, 32>}]} {
    %c0 = arith.constant 0 : index
    %c0_0 = arith.constant 0 : index
    %c0_1 = arith.constant 0 : index
    %0 = vector.load %arg1[%c0, %c0_0, %c0_1] : memref<1x8x32xf32, #tpu.memory_space<vmem>>, vector<1x8x32xf32>
    %1 = vector.shape_cast %0 : vector<1x8x32xf32> to vector<8x32xf32>
    %c0_2 = arith.constant 0 : index
    %c0_3 = arith.constant 0 : index
    %2 = vector.load %arg3[%c0_2, %c0_3] : memref<1x32xf32, #tpu.memory_space<vmem>>, vector<1x32xf32>
    %c0_4 = arith.constant 0 : index
    %c0_5 = arith.constant 0 : index
    %3 = vector.load %arg4[%c0_4, %c0_5] : memref<1x32xf32, #tpu.memory_space<vmem>>, vector<1x32xf32>
    %cst = arith.constant dense<0.000000e+00> : vector<8xf32>
    %4 = vector.multi_reduction <add>, %1, %cst [1] : vector<8x32xf32> to vector<8xf32>
    %5 = vector.shape_cast %4 : vector<8xf32> to vector<8x1xf32>
    %cst_6 = arith.constant 3.200000e+01 : f32
    %6 = vector.broadcast %cst_6 : f32 to vector<8x1xf32>
    %7 = arith.divf %5, %6 : vector<8x1xf32>
    %8 = vector.broadcast %7 : vector<8x1xf32> to vector<8x32xf32>
    %9 = arith.subf %1, %8 : vector<8x32xf32>
    %10 = arith.mulf %9, %9 : vector<8x32xf32>
    %cst_7 = arith.constant dense<0.000000e+00> : vector<8xf32>
    %11 = vector.multi_reduction <add>, %10, %cst_7 [1] : vector<8x32xf32> to vector<8xf32>
    %12 = vector.shape_cast %11 : vector<8xf32> to vector<8x1xf32>
    %cst_8 = arith.constant 3.200000e+01 : f32
    %13 = vector.broadcast %cst_8 : f32 to vector<8x1xf32>
    %14 = arith.divf %12, %13 : vector<8x1xf32>
    %15 = vector.broadcast %7 : vector<8x1xf32> to vector<8x32xf32>
    %16 = arith.subf %1, %15 : vector<8x32xf32>
    %cst_9 = arith.constant 9.99999996E-13 : f32
    %17 = vector.broadcast %cst_9 : f32 to vector<8x1xf32>
    %18 = arith.addf %14, %17 : vector<8x1xf32>
    %19 = math.rsqrt %18 : vector<8x1xf32>
    %20 = vector.broadcast %19 : vector<8x1xf32> to vector<8x32xf32>
    %21 = arith.mulf %16, %20 : vector<8x32xf32>
    %22 = vector.broadcast %2 : vector<1x32xf32> to vector<8x32xf32>
    %23 = arith.mulf %21, %22 : vector<8x32xf32>
    %24 = vector.broadcast %3 : vector<1x32xf32> to vector<8x32xf32>
    %25 = arith.addf %23, %24 : vector<8x32xf32>
    %26 = arith.truncf %25 : vector<8x32xf32> to vector<8x32xbf16>
    %c0_10 = arith.constant 0 : index
    %c0_11 = arith.constant 0 : index
    %27 = vector.load %arg5[%c0_10, %c0_11] : memref<32x32xbf16, #tpu.memory_space<vmem>>, vector<32x32xbf16>
    %cst_12 = arith.constant dense<0.000000e+00> : vector<8x32xf32>
    %28 = tpu.matmul %26, %27, %cst_12 {dimension_numbers = #tpu.dot_dimension_numbers<[1], [0], [0], [1], [0, 0, 1, 1], [], []>} : vector<8x32xbf16>, vector<32x32xbf16>, vector<8x32xf32> -> vector<8x32xf32>
    %c0_13 = arith.constant 0 : index
    %c0_14 = arith.constant 0 : index
    %29 = vector.load %arg6[%c0_13, %c0_14] : memref<1x32xf32, #tpu.memory_space<vmem>>, vector<1x32xf32>
    %30 = vector.broadcast %29 : vector<1x32xf32> to vector<8x32xf32>
    %31 = arith.addf %28, %30 : vector<8x32xf32>
    %c0_15 = arith.constant 0 : index
    %c0_16 = arith.constant 0 : index
    %32 = vector.load %arg7[%c0_15, %c0_16] : memref<32x32xbf16, #tpu.memory_space<vmem>>, vector<32x32xbf16>
    %cst_17 = arith.constant dense<0.000000e+00> : vector<8x32xf32>
    %33 = tpu.matmul %26, %32, %cst_17 {dimension_numbers = #tpu.dot_dimension_numbers<[1], [0], [0], [1], [0, 0, 1, 1], [], []>} : vector<8x32xbf16>, vector<32x32xbf16>, vector<8x32xf32> -> vector<8x32xf32>
    %c0_18 = arith.constant 0 : index
    %c0_19 = arith.constant 0 : index
    %34 = vector.load %arg8[%c0_18, %c0_19] : memref<1x32xf32, #tpu.memory_space<vmem>>, vector<1x32xf32>
    %35 = vector.broadcast %34 : vector<1x32xf32> to vector<8x32xf32>
    %36 = arith.addf %33, %35 : vector<8x32xf32>
    %c0_20 = arith.constant 0 : index
    %c0_21 = arith.constant 0 : index
    %37 = vector.load %arg9[%c0_20, %c0_21] : memref<32x32xbf16, #tpu.memory_space<vmem>>, vector<32x32xbf16>
    %cst_22 = arith.constant dense<0.000000e+00> : vector<8x32xf32>
    %38 = tpu.matmul %26, %37, %cst_22 {dimension_numbers = #tpu.dot_dimension_numbers<[1], [0], [0], [1], [0, 0, 1, 1], [], []>} : vector<8x32xbf16>, vector<32x32xbf16>, vector<8x32xf32> -> vector<8x32xf32>
    %c0_23 = arith.constant 0 : index
    %c0_24 = arith.constant 0 : index
    %39 = vector.load %arg10[%c0_23, %c0_24] : memref<1x32xf32, #tpu.memory_space<vmem>>, vector<1x32xf32>
    %40 = vector.broadcast %39 : vector<1x32xf32> to vector<8x32xf32>
    %41 = arith.addf %38, %40 : vector<8x32xf32>
    %cst_25 = arith.constant 0.353553385 : f32
    %42 = vector.broadcast %cst_25 : f32 to vector<8x32xf32>
    %43 = arith.mulf %31, %42 : vector<8x32xf32>
    %44 = vector.shape_cast %43 : vector<8x32xf32> to vector<8x4x8xf32>
    %45 = tpu.transpose %44, [1, 0, 2] : vector<8x4x8xf32> -> vector<4x8x8xf32>
    %46 = arith.truncf %45 : vector<4x8x8xf32> to vector<4x8x8xbf16>
    %47 = vector.shape_cast %36 : vector<8x32xf32> to vector<8x4x8xf32>
    %48 = tpu.transpose %47, [1, 0, 2] : vector<8x4x8xf32> -> vector<4x8x8xf32>
    %49 = arith.truncf %48 : vector<4x8x8xf32> to vector<4x8x8xbf16>
    %50 = vector.shape_cast %41 : vector<8x32xf32> to vector<8x4x8xf32>
    %51 = tpu.transpose %50, [1, 0, 2] : vector<8x4x8xf32> -> vector<4x8x8xf32>
    %52 = arith.truncf %51 : vector<4x8x8xf32> to vector<4x8x8xbf16>
    "tpu.trace_start"() <{level = 10 : i32, message = "hqd,hkd->hqk"}> : () -> ()
    %cst_26 = arith.constant dense<0.000000e+00> : vector<4x8x8xf32>
    %53 = tpu.matmul %46, %49, %cst_26 {dimension_numbers = #tpu.dot_dimension_numbers<[2], [2], [1], [1], [0, 0, 0, 1, 1, 1], [0], [0]>} : vector<4x8x8xbf16>, vector<4x8x8xbf16>, vector<4x8x8xf32> -> vector<4x8x8xf32>
    "tpu.trace_stop"() : () -> ()
    %c0_27 = arith.constant 0 : index
    %c0_28 = arith.constant 0 : index
    %c0_29 = arith.constant 0 : index
    %54 = vector.load %arg2[%c0_27, %c0_28, %c0_29] : memref<1x1x8xf32, #tpu.memory_space<vmem>>, vector<1x1x8xf32>
    %55 = vector.shape_cast %54 : vector<1x1x8xf32> to vector<1x8xf32>
    %cst_30 = arith.constant 1.000000e+00 : f32
    %56 = vector.broadcast %cst_30 : f32 to vector<1x8xf32>
    %57 = arith.subf %56, %55 : vector<1x8xf32>
    %cst_31 = arith.constant -1.000000e+04 : f32
    %58 = vector.broadcast %cst_31 : f32 to vector<1x8xf32>
    %59 = arith.mulf %57, %58 : vector<1x8xf32>
    %60 = vector.shape_cast %59 : vector<1x8xf32> to vector<1x1x8xf32>
    %61 = vector.broadcast %60 : vector<1x1x8xf32> to vector<4x8x8xf32>
    %62 = arith.addf %53, %61 : vector<4x8x8xf32>
    %cst_32 = arith.constant dense<0xFF800000> : vector<4x8xf32>
    %63 = vector.multi_reduction <maximumf>, %62, %cst_32 [2] : vector<4x8x8xf32> to vector<4x8xf32>
    %64 = vector.shape_cast %63 : vector<4x8xf32> to vector<4x8x1xf32>
    %65 = vector.broadcast %64 : vector<4x8x1xf32> to vector<4x8x8xf32>
    %66 = arith.subf %62, %65 : vector<4x8x8xf32>
    %67 = math.exp %66 : vector<4x8x8xf32>
    %cst_33 = arith.constant dense<0.000000e+00> : vector<4x8xf32>
    %68 = vector.multi_reduction <add>, %67, %cst_33 [2] : vector<4x8x8xf32> to vector<4x8xf32>
    %69 = vector.shape_cast %68 : vector<4x8xf32> to vector<4x8x1xf32>
    %70 = tpu.reciprocal %69 {approx = true} : vector<4x8x1xf32> -> vector<4x8x1xf32>
    %71 = vector.broadcast %70 : vector<4x8x1xf32> to vector<4x8x8xf32>
    %72 = arith.mulf %67, %71 : vector<4x8x8xf32>
    %73 = arith.truncf %72 : vector<4x8x8xf32> to vector<4x8x8xbf16>
    "tpu.trace_start"() <{level = 10 : i32, message = "hqk,hkd->hqd"}> : () -> ()
    %cst_34 = arith.constant dense<0.000000e+00> : vector<4x8x8xf32>
    %74 = tpu.matmul %73, %52, %cst_34 {dimension_numbers = #tpu.dot_dimension_numbers<[2], [1], [1], [2], [0, 0, 0, 1, 1, 2], [0], [0]>} : vector<4x8x8xbf16>, vector<4x8x8xbf16>, vector<4x8x8xf32> -> vector<4x8x8xf32>
    "tpu.trace_stop"() : () -> ()
    %75 = tpu.transpose %74, [1, 0, 2] : vector<4x8x8xf32> -> vector<8x4x8xf32>
    %76 = vector.shape_cast %75 : vector<8x4x8xf32> to vector<8x32xf32>
    %77 = arith.truncf %76 : vector<8x32xf32> to vector<8x32xbf16>
    %c0_35 = arith.constant 0 : index
    %c0_36 = arith.constant 0 : index
    %78 = vector.load %arg11[%c0_35, %c0_36] : memref<32x32xbf16, #tpu.memory_space<vmem>>, vector<32x32xbf16>
    %cst_37 = arith.constant dense<0.000000e+00> : vector<8x32xf32>
    %79 = tpu.matmul %77, %78, %cst_37 {dimension_numbers = #tpu.dot_dimension_numbers<[1], [0], [0], [1], [0, 0, 1, 1], [], []>} : vector<8x32xbf16>, vector<32x32xbf16>, vector<8x32xf32> -> vector<8x32xf32>
    %c0_38 = arith.constant 0 : index
    %c0_39 = arith.constant 0 : index
    %80 = vector.load %arg12[%c0_38, %c0_39] : memref<1x32xf32, #tpu.memory_space<vmem>>, vector<1x32xf32>
    %81 = vector.broadcast %80 : vector<1x32xf32> to vector<8x32xf32>
    %82 = arith.addf %79, %81 : vector<8x32xf32>
    %83 = arith.addf %25, %82 : vector<8x32xf32>
    %c0_40 = arith.constant 0 : index
    %c0_41 = arith.constant 0 : index
    %84 = vector.load %arg13[%c0_40, %c0_41] : memref<1x32xf32, #tpu.memory_space<vmem>>, vector<1x32xf32>
    %c0_42 = arith.constant 0 : index
    %c0_43 = arith.constant 0 : index
    %85 = vector.load %arg14[%c0_42, %c0_43] : memref<1x32xf32, #tpu.memory_space<vmem>>, vector<1x32xf32>
    %cst_44 = arith.constant dense<0.000000e+00> : vector<8xf32>
    %86 = vector.multi_reduction <add>, %83, %cst_44 [1] : vector<8x32xf32> to vector<8xf32>
    %87 = vector.shape_cast %86 : vector<8xf32> to vector<8x1xf32>
    %cst_45 = arith.constant 3.200000e+01 : f32
    %88 = vector.broadcast %cst_45 : f32 to vector<8x1xf32>
    %89 = arith.divf %87, %88 : vector<8x1xf32>
    %90 = vector.broadcast %89 : vector<8x1xf32> to vector<8x32xf32>
    %91 = arith.subf %83, %90 : vector<8x32xf32>
    %92 = arith.mulf %91, %91 : vector<8x32xf32>
    %cst_46 = arith.constant dense<0.000000e+00> : vector<8xf32>
    %93 = vector.multi_reduction <add>, %92, %cst_46 [1] : vector<8x32xf32> to vector<8xf32>
    %94 = vector.shape_cast %93 : vector<8xf32> to vector<8x1xf32>
    %cst_47 = arith.constant 3.200000e+01 : f32
    %95 = vector.broadcast %cst_47 : f32 to vector<8x1xf32>
    %96 = arith.divf %94, %95 : vector<8x1xf32>
    %97 = vector.broadcast %89 : vector<8x1xf32> to vector<8x32xf32>
    %98 = arith.subf %83, %97 : vector<8x32xf32>
    %cst_48 = arith.constant 9.99999996E-13 : f32
    %99 = vector.broadcast %cst_48 : f32 to vector<8x1xf32>
    %100 = arith.addf %96, %99 : vector<8x1xf32>
    %101 = math.rsqrt %100 : vector<8x1xf32>
    %102 = vector.broadcast %101 : vector<8x1xf32> to vector<8x32xf32>
    %103 = arith.mulf %98, %102 : vector<8x32xf32>
    %104 = vector.broadcast %84 : vector<1x32xf32> to vector<8x32xf32>
    %105 = arith.mulf %103, %104 : vector<8x32xf32>
    %106 = vector.broadcast %85 : vector<1x32xf32> to vector<8x32xf32>
    %107 = arith.addf %105, %106 : vector<8x32xf32>
    %c0_49 = arith.constant 0 : index
    %c0_50 = arith.constant 0 : index
    %c0_51 = arith.constant 0 : index
    %108 = vector.load %arg15[%c0_49, %c0_50, %c0_51] : memref<1x8x32xf32, #tpu.memory_space<vmem>>, vector<1x8x32xf32>
    %109 = vector.shape_cast %108 : vector<1x8x32xf32> to vector<8x32xf32>
    %110 = vector.shape_cast %107 : vector<8x32xf32> to vector<1x8x32xf32>
    tpu.vector_store %arg15[%c0_49, %c0_50, %c0_51], %110 {strides = array<i32>} : memref<1x8x32xf32, #tpu.memory_space<vmem>>, vector<1x8x32xf32>,
    return
  }
  func.func @transform_0(%arg0: i32) -> (i32, i32, i32) {
    %c0_i32 = arith.constant 0 : i32
    %c0_i32_0 = arith.constant 0 : i32
    %c0_i32_1 = arith.constant 0 : i32
    return %arg0, %c0_i32, %c0_i32_0 : i32, i32, i32
  }
  func.func @transform_1(%arg0: i32) -> (i32, i32, i32) {
    %c0_i32 = arith.constant 0 : i32
    %c0_i32_0 = arith.constant 0 : i32
    %c0_i32_1 = arith.constant 0 : i32
    return %arg0, %c0_i32, %c0_i32_0 : i32, i32, i32
  }
  func.func @transform_2(%arg0: i32) -> (i32, i32) {
    %c0_i32 = arith.constant 0 : i32
    %c0_i32_0 = arith.constant 0 : i32
    %c0_i32_1 = arith.constant 0 : i32
    return %c0_i32, %c0_i32_0 : i32, i32
  }
  func.func @transform_3(%arg0: i32) -> (i32, i32) {
    %c0_i32 = arith.constant 0 : i32
    %c0_i32_0 = arith.constant 0 : i32
    %c0_i32_1 = arith.constant 0 : i32
    return %c0_i32, %c0_i32_0 : i32, i32
  }
  func.func @transform_4(%arg0: i32) -> (i32, i32) {
    %c0_i32 = arith.constant 0 : i32
    %c0_i32_0 = arith.constant 0 : i32
    %c0_i32_1 = arith.constant 0 : i32
    return %c0_i32, %c0_i32_0 : i32, i32
  }
  func.func @transform_5(%arg0: i32) -> (i32, i32) {
    %c0_i32 = arith.constant 0 : i32
    %c0_i32_0 = arith.constant 0 : i32
    %c0_i32_1 = arith.constant 0 : i32
    return %c0_i32, %c0_i32_0 : i32, i32
  }
  func.func @transform_6(%arg0: i32) -> (i32, i32) {
    %c0_i32 = arith.constant 0 : i32
    %c0_i32_0 = arith.constant 0 : i32
    %c0_i32_1 = arith.constant 0 : i32
    return %c0_i32, %c0_i32_0 : i32, i32
  }
  func.func @transform_7(%arg0: i32) -> (i32, i32) {
    %c0_i32 = arith.constant 0 : i32
    %c0_i32_0 = arith.constant 0 : i32
    %c0_i32_1 = arith.constant 0 : i32
    return %c0_i32, %c0_i32_0 : i32, i32
  }
  func.func @transform_8(%arg0: i32) -> (i32, i32) {
    %c0_i32 = arith.constant 0 : i32
    %c0_i32_0 = arith.constant 0 : i32
    %c0_i32_1 = arith.constant 0 : i32
    return %c0_i32, %c0_i32_0 : i32, i32
  }
  func.func @transform_9(%arg0: i32) -> (i32, i32) {
    %c0_i32 = arith.constant 0 : i32
    %c0_i32_0 = arith.constant 0 : i32
    %c0_i32_1 = arith.constant 0 : i32
    return %c0_i32, %c0_i32_0 : i32, i32
  }
  func.func @transform_10(%arg0: i32) -> (i32, i32) {
    %c0_i32 = arith.constant 0 : i32
    %c0_i32_0 = arith.constant 0 : i32
    %c0_i32_1 = arith.constant 0 : i32
    return %c0_i32, %c0_i32_0 : i32, i32
  }
  func.func @transform_11(%arg0: i32) -> (i32, i32) {
    %c0_i32 = arith.constant 0 : i32
    %c0_i32_0 = arith.constant 0 : i32
    %c0_i32_1 = arith.constant 0 : i32
    return %c0_i32, %c0_i32_0 : i32, i32
  }
  func.func @transform_12(%arg0: i32) -> (i32, i32) {
    %c0_i32 = arith.constant 0 : i32
    %c0_i32_0 = arith.constant 0 : i32
    %c0_i32_1 = arith.constant 0 : i32
    return %c0_i32, %c0_i32_0 : i32, i32
  }
  func.func @transform_13(%arg0: i32) -> (i32, i32) {
    %c0_i32 = arith.constant 0 : i32
    %c0_i32_0 = arith.constant 0 : i32
    %c0_i32_1 = arith.constant 0 : i32
    return %c0_i32, %c0_i32_0 : i32, i32
  }
  func.func @transform_14(%arg0: i32) -> (i32, i32, i32) {
    %c0_i32 = arith.constant 0 : i32
    %c0_i32_0 = arith.constant 0 : i32
    %c0_i32_1 = arith.constant 0 : i32
    return %arg0, %c0_i32, %c0_i32_0 : i32, i32, i32
  }
}

</mosaic_0001>

<llo_original>
// kernel: tpu_custom_call.1
$region0: #{tpu_custom_call.1}
  #allocation0 [shape = 'u32[]', space=smem, size = 0x4, offset = 0x4, fixed_abs, tag = 'smem constant byte address 0x4 - core index']
  #allocation1 [shape = 'u32[144,128]{1,0:T(1,128)}', space=vmem, size = 0x12000, scoped, tag = 'internal scratch']
  %s0 = inlined_call_operand.hbm [shape: f32[2,8,32], index: 0, kind: input, shape index: {}]
  %s1 = inlined_call_operand.hbm [shape: f32[2,1,8], index: 1, kind: input, shape index: {}]
  %s2 = inlined_call_operand.hbm [shape: f32[1,32], index: 2, kind: input, shape index: {}]
  %s3 = inlined_call_operand.hbm [shape: f32[1,32], index: 3, kind: input, shape index: {}]
  %s4 = inlined_call_operand.hbm [shape: bf16[32,32], index: 4, kind: input, shape index: {}]
  %s5 = inlined_call_operand.hbm [shape: f32[1,32], index: 5, kind: input, shape index: {}]
  %s6 = inlined_call_operand.hbm [shape: bf16[32,32], index: 6, kind: input, shape index: {}]
  %s7 = inlined_call_operand.hbm [shape: f32[1,32], index: 7, kind: input, shape index: {}]
  %s8 = inlined_call_operand.hbm [shape: bf16[32,32], index: 8, kind: input, shape index: {}]
  %s9 = inlined_call_operand.hbm [shape: f32[1,32], index: 9, kind: input, shape index: {}]
  %s10 = inlined_call_operand.hbm [shape: bf16[32,32], index: 10, kind: input, shape index: {}]
  %s11 = inlined_call_operand.hbm [shape: f32[1,32], index: 11, kind: input, shape index: {}]
  %s12 = inlined_call_operand.hbm [shape: f32[1,32], index: 12, kind: input, shape index: {}]
  %s13 = inlined_call_operand.hbm [shape: f32[1,32], index: 13, kind: input, shape index: {}]
  %s14 = inlined_call_operand.hbm [shape: f32[2,8,32], index: 14, kind: output, shape index: {}]
  %s15 = sld [smem:[#allocation0]]
  $region145: #{tpu_custom_call.1} parent=0
    _
  %s17 = ssub.s32 1, %s15
  %s18 = scalar_select 0, %s17, %s15
  $region1: #{tpu_custom_call.1} parent=0
    #allocation2 [shape = 'u8[8192]{0}', space=vmem, size = 0x2000, scoped, tag = 'input window, operand 0']
    #allocation3 [shape = 's32[2]{0}', space=sflag, size = 0x8, scoped, tag = 'scoped memory for tpu_custom_call.1']
    #allocation4 [shape = 's32[2]{0}', space=sflag, size = 0x8, scoped, tag = 'scoped memory for tpu_custom_call.1']
    #allocation5 [shape = 'u8[1024]{0}', space=vmem, size = 0x400, scoped, tag = 'input window, operand 1']
    #allocation6 [shape = 's32[2]{0}', space=sflag, size = 0x8, scoped, tag = 'scoped memory for tpu_custom_call.1']
    #allocation7 [shape = 'u8[512]{0}', space=vmem, size = 0x400, scoped, tag = 'input window, operand 2, single buffered']
    #allocation8 [shape = 'u8[512]{0}', space=vmem, size = 0x400, scoped, tag = 'input window, operand 3, single buffered']
    #allocation9 [shape = 's32[1]{0}', space=sflag, size = 0x4, scoped, tag = 'scoped memory for tpu_custom_call.1']
    #allocation10 [shape = 'u8[8192]{0}', space=vmem, size = 0x2000, scoped, tag = 'input window, operand 4, single buffered']
    #allocation11 [shape = 'u8[512]{0}', space=vmem, size = 0x400, scoped, tag = 'input window, operand 5, single buffered']
    #allocation12 [shape = 's32[1]{0}', space=sflag, size = 0x4, scoped, tag = 'scoped memory for tpu_custom_call.1']
    #allocation13 [shape = 'u8[8192]{0}', space=vmem, size = 0x2000, scoped, tag = 'input window, operand 6, single buffered']
    #allocation14 [shape = 'u8[512]{0}', space=vmem, size = 0x400, scoped, tag = 'input window, operand 7, single buffered']
    #allocation15 [shape = 's32[1]{0}', space=sflag, size = 0x4, scoped, tag = 'scoped memory for tpu_custom_call.1']
    #allocation16 [shape = 'u8[8192]{0}', space=vmem, size = 0x2000, scoped, tag = 'input window, operand 8, single buffered']
    #allocation17 [shape = 'u8[512]{0}', space=vmem, size = 0x400, scoped, tag = 'input window, operand 9, single buffered']
    #allocation18 [shape = 's32[1]{0}', space=sflag, size = 0x4, scoped, tag = 'scoped memory for tpu_custom_call.1']
    #allocation19 [shape = 'u8[8192]{0}', space=vmem, size = 0x2000, scoped, tag = 'input window, operand 10, single buffered']
    #allocation20 [shape = 'u8[512]{0}', space=vmem, size = 0x400, scoped, tag = 'input window, operand 11, single buffered']
    #allocation21 [shape = 's32[1]{0}', space=sflag, size = 0x4, scoped, tag = 'scoped memory for tpu_custom_call.1']
    #allocation22 [shape = 'u8[512]{0}', space=vmem, size = 0x400, scoped, tag = 'input window, operand 12, single buffered']
    #allocation23 [shape = 'u8[512]{0}', space=vmem, size = 0x400, scoped, tag = 'input window, operand 13, single buffered']
    #allocation24 [shape = 's32[1]{0}', space=sflag, size = 0x4, scoped, tag = 'scoped memory for tpu_custom_call.1']
    #allocation25 [shape = 'u8[8192]{0}', space=vmem, size = 0x2000, scoped, tag = 'output window, operand 0']
    %19 = vsyncpa [#allocation3], 0
    %s20 = scalar_lea.sflag [#allocation3], 1
    %21 = vsyncpa %s20, 0
    %22 = vsyncpa [#allocation6], 0
    %s23 = scalar_lea.sflag [#allocation6], 1
    %24 = vsyncpa %s23, 0
    %25 = vsyncpa [#allocation9], 0
    %26 = vsyncpa [#allocation12], 0
    %27 = vsyncpa [#allocation15], 0
    %28 = vsyncpa [#allocation18], 0
    %29 = vsyncpa [#allocation21], 0
    %30 = vsyncpa [#allocation24], 0
    %31 = vsyncpa [#allocation4], 0
    %s32 = scalar_lea.sflag [#allocation4], 1
    %33 = vsyncpa %s32, 0
    loop: start=0, step=1, limit=4
    $region2: #{tpu_custom_call.1} parent=1 // loop_pre_header
      _
    $region3: #{tpu_custom_call.1} parent=1 // loop_header
      %s35 = sphi 0, %s39
      %p36 = scmp.ge.s32.totalorder %s35, 4
      %s45 = sphi 0, %s47
      %s48 = sphi 0, %s45
      %s49 = sphi 0, %s48
      %s65 = sphi 0, %s49
      %s71 = sphi 0, %s73
      %s74 = sphi 0, %s71
      %s75 = sphi 0, %s74
      %s91 = sphi 0, %s75
      %s95 = sphi 0, %s95
      %s97 = sphi 0, %s95
      %s98 = sphi 0, %s97
      %s112 = sphi 0, %s98
      %s116 = sphi 0, %s116
      %s118 = sphi 0, %s116
      %s119 = sphi 0, %s118
      %s133 = sphi 0, %s119
      %s137 = sphi 0, %s137
      %s139 = sphi 0, %s137
      %s140 = sphi 0, %s139
      %s154 = sphi 0, %s140
      %s158 = sphi 0, %s158
      %s160 = sphi 0, %s158
      %s161 = sphi 0, %s160
      %s175 = sphi 0, %s161
      %s179 = sphi 0, %s179
      %s181 = sphi 0, %s179
      %s182 = sphi 0, %s181
      %s196 = sphi 0, %s182
      %s200 = sphi 0, %s200
      %s202 = sphi 0, %s200
      %s203 = sphi 0, %s202
      %s217 = sphi 0, %s203
      %s221 = sphi 0, %s221
      %s223 = sphi 0, %s221
      %s224 = sphi 0, %s223
      %s238 = sphi 0, %s224
      %s242 = sphi 0, %s242
      %s244 = sphi 0, %s242
      %s245 = sphi 0, %s244
      %s259 = sphi 0, %s245
      %s263 = sphi 0, %s263
      %s265 = sphi 0, %s263
      %s266 = sphi 0, %s265
      %s280 = sphi 0, %s266
      %s284 = sphi 0, %s284
      %s286 = sphi 0, %s284
      %s287 = sphi 0, %s286
      %s301 = sphi 0, %s287
      %s305 = sphi 0, %s305
      %s307 = sphi 0, %s305
      %s308 = sphi 0, %s307
      %s322 = sphi 0, %s308
      %s326 = sphi 0, %s326
      %s328 = sphi 0, %s326
      %s329 = sphi 0, %s328
      %s343 = sphi 0, %s329
      %s349 = sphi 0, %s351
      %s352 = sphi 0, %s349
      %s353 = sphi 0, %s352
      %s369 = sphi 0, %s353
    $region4: #{tpu_custom_call.1} parent=1 // loop_header_branch
      %38 = sbr.rel (%p36) target = $region8
    $region5: #{tpu_custom_call.1} parent=1 // loop_body
      %s40 = ssub.s32 %s35, 1
      %s41 = ssub.s32 %s35, 2
      %s42 = sadd.s32 %s35, 1
      %s43 = ssub.s32 %s35, %s42
      %p44 = scmp.eq.s32.totalorder %s43, 0
      %s46 = sadd.s32 %s45, 1
      %s47 = scalar_select %p44, %s45, %s46
      %p50 = pneg %p44
      %p51 = scmp.eq.s32.totalorder %s35, 1
      %p52 = por %p50, %p51
      %p53 = scmp.ne.s32.totalorder %s45, %s48
      %p54 = scmp.eq.s32.totalorder %s35, 0
      %p55 = por %p53, %p54
      %p56 = scmp.ne.s32.totalorder %s45, %s48
      %p57 = scmp.eq.s32.totalorder %s40, 1
      %p58 = por %p56, %p57
      %p59 = scmp.ne.s32.totalorder %s48, %s49
      %p60 = scmp.eq.s32.totalorder %s40, 0
      %p61 = por %p59, %p60
      %p62 = scmp.ne.s32.totalorder %s48, %s49
      %p63 = scmp.eq.s32.totalorder %s41, 1
      %p64 = por %p62, %p63
      %p66 = scmp.ne.s32.totalorder %s49, %s65
      %p67 = scmp.eq.s32.totalorder %s41, 0
      %p68 = por %p66, %p67
      %s69 = ssub.s32 %s35, %s42
      %p70 = scmp.eq.s32.totalorder %s69, 0
      %s72 = sadd.s32 %s71, 1
      %s73 = scalar_select %p70, %s71, %s72
      %p76 = pneg %p70
      %p77 = scmp.eq.s32.totalorder %s35, 1
      %p78 = por %p76, %p77
      %p79 = scmp.ne.s32.totalorder %s71, %s74
      %p80 = scmp.eq.s32.totalorder %s35, 0
      %p81 = por %p79, %p80
      %p82 = scmp.ne.s32.totalorder %s71, %s74
      %p83 = scmp.eq.s32.totalorder %s40, 1
      %p84 = por %p82, %p83
      %p85 = scmp.ne.s32.totalorder %s74, %s75
      %p86 = scmp.eq.s32.totalorder %s40, 0
      %p87 = por %p85, %p86
      %p88 = scmp.ne.s32.totalorder %s74, %s75
      %p89 = scmp.eq.s32.totalorder %s41, 1
      %p90 = por %p88, %p89
      %p92 = scmp.ne.s32.totalorder %s75, %s91
      %p93 = scmp.eq.s32.totalorder %s41, 0
      %p94 = por %p92, %p93
      %s96 = sadd.s32 %s95, 1
      %p99 = scmp.eq.s32.totalorder %s35, 1
      %p100 = scmp.ne.s32.totalorder %s95, %s97
      %p101 = scmp.eq.s32.totalorder %s35, 0
      %p102 = por %p100, %p101
      %p103 = scmp.ne.s32.totalorder %s95, %s97
      %p104 = scmp.eq.s32.totalorder %s40, 1
      %p105 = por %p103, %p104
      %p106 = scmp.ne.s32.totalorder %s97, %s98
      %p107 = scmp.eq.s32.totalorder %s40, 0
      %p108 = por %p106, %p107
      %p109 = scmp.ne.s32.totalorder %s97, %s98
      %p110 = scmp.eq.s32.totalorder %s41, 1
      %p111 = por %p109, %p110
      %p113 = scmp.ne.s32.totalorder %s98, %s112
      %p114 = scmp.eq.s32.totalorder %s41, 0
      %p115 = por %p113, %p114
      %s117 = sadd.s32 %s116, 1
      %p120 = scmp.eq.s32.totalorder %s35, 1
      %p121 = scmp.ne.s32.totalorder %s116, %s118
      %p122 = scmp.eq.s32.totalorder %s35, 0
      %p123 = por %p121, %p122
      %p124 = scmp.ne.s32.totalorder %s116, %s118
      %p125 = scmp.eq.s32.totalorder %s40, 1
      %p126 = por %p124, %p125
      %p127 = scmp.ne.s32.totalorder %s118, %s119
      %p128 = scmp.eq.s32.totalorder %s40, 0
      %p129 = por %p127, %p128
      %p130 = scmp.ne.s32.totalorder %s118, %s119
      %p131 = scmp.eq.s32.totalorder %s41, 1
      %p132 = por %p130, %p131
      %p134 = scmp.ne.s32.totalorder %s119, %s133
      %p135 = scmp.eq.s32.totalorder %s41, 0
      %p136 = por %p134, %p135
      %s138 = sadd.s32 %s137, 1
      %p141 = scmp.eq.s32.totalorder %s35, 1
      %p142 = scmp.ne.s32.totalorder %s137, %s139
      %p143 = scmp.eq.s32.totalorder %s35, 0
      %p144 = por %p142, %p143
      %p145 = scmp.ne.s32.totalorder %s137, %s139
      %p146 = scmp.eq.s32.totalorder %s40, 1
      %p147 = por %p145, %p146
      %p148 = scmp.ne.s32.totalorder %s139, %s140
      %p149 = scmp.eq.s32.totalorder %s40, 0
      %p150 = por %p148, %p149
      %p151 = scmp.ne.s32.totalorder %s139, %s140
      %p152 = scmp.eq.s32.totalorder %s41, 1
      %p153 = por %p151, %p152
      %p155 = scmp.ne.s32.totalorder %s140, %s154
      %p156 = scmp.eq.s32.totalorder %s41, 0
      %p157 = por %p155, %p156
      %s159 = sadd.s32 %s158, 1
      %p162 = scmp.eq.s32.totalorder %s35, 1
      %p163 = scmp.ne.s32.totalorder %s158, %s160
      %p164 = scmp.eq.s32.totalorder %s35, 0
      %p165 = por %p163, %p164
      %p166 = scmp.ne.s32.totalorder %s158, %s160
      %p167 = scmp.eq.s32.totalorder %s40, 1
      %p168 = por %p166, %p167
      %p169 = scmp.ne.s32.totalorder %s160, %s161
      %p170 = scmp.eq.s32.totalorder %s40, 0
      %p171 = por %p169, %p170
      %p172 = scmp.ne.s32.totalorder %s160, %s161
      %p173 = scmp.eq.s32.totalorder %s41, 1
      %p174 = por %p172, %p173
      %p176 = scmp.ne.s32.totalorder %s161, %s175
      %p177 = scmp.eq.s32.totalorder %s41, 0
      %p178 = por %p176, %p177
      %s180 = sadd.s32 %s179, 1
      %p183 = scmp.eq.s32.totalorder %s35, 1
      %p184 = scmp.ne.s32.totalorder %s179, %s181
      %p185 = scmp.eq.s32.totalorder %s35, 0
      %p186 = por %p184, %p185
      %p187 = scmp.ne.s32.totalorder %s179, %s181
      %p188 = scmp.eq.s32.totalorder %s40, 1
      %p189 = por %p187, %p188
      %p190 = scmp.ne.s32.totalorder %s181, %s182
      %p191 = scmp.eq.s32.totalorder %s40, 0
      %p192 = por %p190, %p191
      %p193 = scmp.ne.s32.totalorder %s181, %s182
      %p194 = scmp.eq.s32.totalorder %s41, 1
      %p195 = por %p193, %p194
      %p197 = scmp.ne.s32.totalorder %s182, %s196
      %p198 = scmp.eq.s32.totalorder %s41, 0
      %p199 = por %p197, %p198
      %s201 = sadd.s32 %s200, 1
      %p204 = scmp.eq.s32.totalorder %s35, 1
      %p205 = scmp.ne.s32.totalorder %s200, %s202
      %p206 = scmp.eq.s32.totalorder %s35, 0
      %p207 = por %p205, %p206
      %p208 = scmp.ne.s32.totalorder %s200, %s202
      %p209 = scmp.eq.s32.totalorder %s40, 1
      %p210 = por %p208, %p209
      %p211 = scmp.ne.s32.totalorder %s202, %s203
      %p212 = scmp.eq.s32.totalorder %s40, 0
      %p213 = por %p211, %p212
      %p214 = scmp.ne.s32.totalorder %s202, %s203
      %p215 = scmp.eq.s32.totalorder %s41, 1
      %p216 = por %p214, %p215
      %p218 = scmp.ne.s32.totalorder %s203, %s217
      %p219 = scmp.eq.s32.totalorder %s41, 0
      %p220 = por %p218, %p219
      %s222 = sadd.s32 %s221, 1
      %p225 = scmp.eq.s32.totalorder %s35, 1
      %p226 = scmp.ne.s32.totalorder %s221, %s223
      %p227 = scmp.eq.s32.totalorder %s35, 0
      %p228 = por %p226, %p227
      %p229 = scmp.ne.s32.totalorder %s221, %s223
      %p230 = scmp.eq.s32.totalorder %s40, 1
      %p231 = por %p229, %p230
      %p232 = scmp.ne.s32.totalorder %s223, %s224
      %p233 = scmp.eq.s32.totalorder %s40, 0
      %p234 = por %p232, %p233
      %p235 = scmp.ne.s32.totalorder %s223, %s224
      %p236 = scmp.eq.s32.totalorder %s41, 1
      %p237 = por %p235, %p236
      %p239 = scmp.ne.s32.totalorder %s224, %s238
      %p240 = scmp.eq.s32.totalorder %s41, 0
      %p241 = por %p239, %p240
      %s243 = sadd.s32 %s242, 1
      %p246 = scmp.eq.s32.totalorder %s35, 1
      %p247 = scmp.ne.s32.totalorder %s242, %s244
      %p248 = scmp.eq.s32.totalorder %s35, 0
      %p249 = por %p247, %p248
      %p250 = scmp.ne.s32.totalorder %s242, %s244
      %p251 = scmp.eq.s32.totalorder %s40, 1
      %p252 = por %p250, %p251
      %p253 = scmp.ne.s32.totalorder %s244, %s245
      %p254 = scmp.eq.s32.totalorder %s40, 0
      %p255 = por %p253, %p254
      %p256 = scmp.ne.s32.totalorder %s244, %s245
      %p257 = scmp.eq.s32.totalorder %s41, 1
      %p258 = por %p256, %p257
      %p260 = scmp.ne.s32.totalorder %s245, %s259
      %p261 = scmp.eq.s32.totalorder %s41, 0
      %p262 = por %p260, %p261
      %s264 = sadd.s32 %s263, 1
      %p267 = scmp.eq.s32.totalorder %s35, 1
      %p268 = scmp.ne.s32.totalorder %s263, %s265
      %p269 = scmp.eq.s32.totalorder %s35, 0
      %p270 = por %p268, %p269
      %p271 = scmp.ne.s32.totalorder %s263, %s265
      %p272 = scmp.eq.s32.totalorder %s40, 1
      %p273 = por %p271, %p272
      %p274 = scmp.ne.s32.totalorder %s265, %s266
      %p275 = scmp.eq.s32.totalorder %s40, 0
      %p276 = por %p274, %p275
      %p277 = scmp.ne.s32.totalorder %s265, %s266
      %p278 = scmp.eq.s32.totalorder %s41, 1
      %p279 = por %p277, %p278
      %p281 = scmp.ne.s32.totalorder %s266, %s280
      %p282 = scmp.eq.s32.totalorder %s41, 0
      %p283 = por %p281, %p282
      %s285 = sadd.s32 %s284, 1
      %p288 = scmp.eq.s32.totalorder %s35, 1
      %p289 = scmp.ne.s32.totalorder %s284, %s286
      %p290 = scmp.eq.s32.totalorder %s35, 0
      %p291 = por %p289, %p290
      %p292 = scmp.ne.s32.totalorder %s284, %s286
      %p293 = scmp.eq.s32.totalorder %s40, 1
      %p294 = por %p292, %p293
      %p295 = scmp.ne.s32.totalorder %s286, %s287
      %p296 = scmp.eq.s32.totalorder %s40, 0
      %p297 = por %p295, %p296
      %p298 = scmp.ne.s32.totalorder %s286, %s287
      %p299 = scmp.eq.s32.totalorder %s41, 1
      %p300 = por %p298, %p299
      %p302 = scmp.ne.s32.totalorder %s287, %s301
      %p303 = scmp.eq.s32.totalorder %s41, 0
      %p304 = por %p302, %p303
      %s306 = sadd.s32 %s305, 1
      %p309 = scmp.eq.s32.totalorder %s35, 1
      %p310 = scmp.ne.s32.totalorder %s305, %s307
      %p311 = scmp.eq.s32.totalorder %s35, 0
      %p312 = por %p310, %p311
      %p313 = scmp.ne.s32.totalorder %s305, %s307
      %p314 = scmp.eq.s32.totalorder %s40, 1
      %p315 = por %p313, %p314
      %p316 = scmp.ne.s32.totalorder %s307, %s308
      %p317 = scmp.eq.s32.totalorder %s40, 0
      %p318 = por %p316, %p317
      %p319 = scmp.ne.s32.totalorder %s307, %s308
      %p320 = scmp.eq.s32.totalorder %s41, 1
      %p321 = por %p319, %p320
      %p323 = scmp.ne.s32.totalorder %s308, %s322
      %p324 = scmp.eq.s32.totalorder %s41, 0
      %p325 = por %p323, %p324
      %s327 = sadd.s32 %s326, 1
      %p330 = scmp.eq.s32.totalorder %s35, 1
      %p331 = scmp.ne.s32.totalorder %s326, %s328
      %p332 = scmp.eq.s32.totalorder %s35, 0
      %p333 = por %p331, %p332
      %p334 = scmp.ne.s32.totalorder %s326, %s328
      %p335 = scmp.eq.s32.totalorder %s40, 1
      %p336 = por %p334, %p335
      %p337 = scmp.ne.s32.totalorder %s328, %s329
      %p338 = scmp.eq.s32.totalorder %s40, 0
      %p339 = por %p337, %p338
      %p340 = scmp.ne.s32.totalorder %s328, %s329
      %p341 = scmp.eq.s32.totalorder %s41, 1
      %p342 = por %p340, %p341
      %p344 = scmp.ne.s32.totalorder %s329, %s343
      %p345 = scmp.eq.s32.totalorder %s41, 0
      %p346 = por %p344, %p345
      %s347 = ssub.s32 %s35, %s42
      %p348 = scmp.eq.s32.totalorder %s347, 0
      %s350 = sadd.s32 %s349, 1
      %s351 = scalar_select %p348, %s349, %s350
      %p354 = pneg %p348
      %p355 = scmp.eq.s32.totalorder %s35, 1
      %p356 = por %p354, %p355
      %p357 = scmp.ne.s32.totalorder %s349, %s352
      %p358 = scmp.eq.s32.totalorder %s35, 0
      %p359 = por %p357, %p358
      %p360 = scmp.ne.s32.totalorder %s349, %s352
      %p361 = scmp.eq.s32.totalorder %s40, 1
      %p362 = por %p360, %p361
      %p363 = scmp.ne.s32.totalorder %s352, %s353
      %p364 = scmp.eq.s32.totalorder %s40, 0
      %p365 = por %p363, %p364
      %p366 = scmp.ne.s32.totalorder %s352, %s353
      %p367 = scmp.eq.s32.totalorder %s41, 1
      %p368 = por %p366, %p367
      %p370 = scmp.ne.s32.totalorder %s353, %s369
      %p371 = scmp.eq.s32.totalorder %s41, 0
      %p372 = por %p370, %p371
      %p373 = scmp.le.s32.totalorder 1, %s35
      %p374 = scmp.lt.s32.totalorder %s35, 3
      %p375 = pnand %p373, %p374
      %p376 = pneg %p375
      // Predicated region
      $region9: #{tpu_custom_call.1} parent=5 // pred_check
        _
      $region10: #{tpu_custom_call.1} parent=5 // pred_check_branch
        %378 = sbr.rel (%p375) target = $region12
      $region11: #{tpu_custom_call.1} parent=5 // pred_region
        %s379 = ssub.s32 %s35, 1
        // Predicated region
        $region13: #{tpu_custom_call.1} parent=11 // pred_check
          %p380 = pneg %p108
        $region14: #{tpu_custom_call.1} parent=11 // pred_check_branch
          %382 = sbr.rel (%p380) target = $region16
        $region15: #{tpu_custom_call.1} parent=11 // pred_region
          %s384 = ssub.s32 16, 16
          %385 = vsyncadd [#allocation6], %s384
          %s387 = sshll.u32 [#allocation7], 4
          %s388 = int_to_ptr.vmem [resolvable:$true] %s387
          %390 = dma.hbm_to_vmem [thread:$0]  %s2, 16, %s388, [#allocation6]
        $region16: #{tpu_custom_call.1} parent=11 // pred_fallthru
          _
        // Predicated region
        $region17: #{tpu_custom_call.1} parent=11 // pred_check
          %p391 = pneg %p129
        $region18: #{tpu_custom_call.1} parent=11 // pred_check_branch
          %393 = sbr.rel (%p391) target = $region20
        $region19: #{tpu_custom_call.1} parent=11 // pred_region
          %s395 = ssub.s32 16, 16
          %396 = vsyncadd [#allocation9], %s395
          %s398 = sshll.u32 [#allocation8], 4
          %s399 = int_to_ptr.vmem [resolvable:$true] %s398
          %401 = dma.hbm_to_vmem [thread:$0]  %s3, 16, %s399, [#allocation9]
        $region20: #{tpu_custom_call.1} parent=11 // pred_fallthru
          _
        // Predicated region
        $region21: #{tpu_custom_call.1} parent=11 // pred_check
          %p402 = pneg %p150
        $region22: #{tpu_custom_call.1} parent=11 // pred_check_branch
          %404 = sbr.rel (%p402) target = $region24
        $region23: #{tpu_custom_call.1} parent=11 // pred_region
          %s406 = ssub.s32 256, 256
          %407 = vsyncadd [#allocation9], %s406
          %s408 = sshll.u32 [#allocation10], 4
          %s409 = int_to_ptr.vmem [resolvable:$true] %s408
          %414 = dma.hbm_to_vmem [thread:$0]  %s4, 256, %s409, [#allocation9], 64, 64, 4
        $region24: #{tpu_custom_call.1} parent=11 // pred_fallthru
          _
        // Predicated region
        $region25: #{tpu_custom_call.1} parent=11 // pred_check
          %p415 = pneg %p171
        $region26: #{tpu_custom_call.1} parent=11 // pred_check_branch
          %417 = sbr.rel (%p415) target = $region28
        $region27: #{tpu_custom_call.1} parent=11 // pred_region
          %s419 = ssub.s32 16, 16
          %420 = vsyncadd [#allocation12], %s419
          %s422 = sshll.u32 [#allocation11], 4
          %s423 = int_to_ptr.vmem [resolvable:$true] %s422
          %425 = dma.hbm_to_vmem [thread:$0]  %s5, 16, %s423, [#allocation12]
        $region28: #{tpu_custom_call.1} parent=11 // pred_fallthru
          _
        // Predicated region
        $region29: #{tpu_custom_call.1} parent=11 // pred_check
          %p426 = pneg %p192
        $region30: #{tpu_custom_call.1} parent=11 // pred_check_branch
          %428 = sbr.rel (%p426) target = $region32
        $region31: #{tpu_custom_call.1} parent=11 // pred_region
          %s430 = ssub.s32 256, 256
          %431 = vsyncadd [#allocation12], %s430
          %s432 = sshll.u32 [#allocation13], 4
          %s433 = int_to_ptr.vmem [resolvable:$true] %s432
          %438 = dma.hbm_to_vmem [thread:$0]  %s6, 256, %s433, [#allocation12], 64, 64, 4
        $region32: #{tpu_custom_call.1} parent=11 // pred_fallthru
          _
        // Predicated region
        $region33: #{tpu_custom_call.1} parent=11 // pred_check
          %p439 = pneg %p213
        $region34: #{tpu_custom_call.1} parent=11 // pred_check_branch
          %441 = sbr.rel (%p439) target = $region36
        $region35: #{tpu_custom_call.1} parent=11 // pred_region
          %s443 = ssub.s32 16, 16
          %444 = vsyncadd [#allocation15], %s443
          %s446 = sshll.u32 [#allocation14], 4
          %s447 = int_to_ptr.vmem [resolvable:$true] %s446
          %449 = dma.hbm_to_vmem [thread:$0]  %s7, 16, %s447, [#allocation15]
        $region36: #{tpu_custom_call.1} parent=11 // pred_fallthru
          _
        // Predicated region
        $region37: #{tpu_custom_call.1} parent=11 // pred_check
          %p450 = pneg %p234
        $region38: #{tpu_custom_call.1} parent=11 // pred_check_branch
          %452 = sbr.rel (%p450) target = $region40
        $region39: #{tpu_custom_call.1} parent=11 // pred_region
          %s454 = ssub.s32 256, 256
          %455 = vsyncadd [#allocation15], %s454
          %s456 = sshll.u32 [#allocation16], 4
          %s457 = int_to_ptr.vmem [resolvable:$true] %s456
          %462 = dma.hbm_to_vmem [thread:$0]  %s8, 256, %s457, [#allocation15], 64, 64, 4
        $region40: #{tpu_custom_call.1} parent=11 // pred_fallthru
          _
        // Predicated region
        $region41: #{tpu_custom_call.1} parent=11 // pred_check
          %p463 = pneg %p255
        $region42: #{tpu_custom_call.1} parent=11 // pred_check_branch
          %465 = sbr.rel (%p463) target = $region44
        $region43: #{tpu_custom_call.1} parent=11 // pred_region
          %s467 = ssub.s32 16, 16
          %468 = vsyncadd [#allocation18], %s467
          %s470 = sshll.u32 [#allocation17], 4
          %s471 = int_to_ptr.vmem [resolvable:$true] %s470
          %473 = dma.hbm_to_vmem [thread:$0]  %s9, 16, %s471, [#allocation18]
        $region44: #{tpu_custom_call.1} parent=11 // pred_fallthru
          _
        // Predicated region
        $region45: #{tpu_custom_call.1} parent=11 // pred_check
          %p474 = pneg %p276
        $region46: #{tpu_custom_call.1} parent=11 // pred_check_branch
          %476 = sbr.rel (%p474) target = $region48
        $region47: #{tpu_custom_call.1} parent=11 // pred_region
          %s478 = ssub.s32 256, 256
          %479 = vsyncadd [#allocation18], %s478
          %s480 = sshll.u32 [#allocation19], 4
          %s481 = int_to_ptr.vmem [resolvable:$true] %s480
          %486 = dma.hbm_to_vmem [thread:$0]  %s10, 256, %s481, [#allocation18], 64, 64, 4
        $region48: #{tpu_custom_call.1} parent=11 // pred_fallthru
          _
        // Predicated region
        $region49: #{tpu_custom_call.1} parent=11 // pred_check
          %p487 = pneg %p297
        $region50: #{tpu_custom_call.1} parent=11 // pred_check_branch
          %489 = sbr.rel (%p487) target = $region52
        $region51: #{tpu_custom_call.1} parent=11 // pred_region
          %s491 = ssub.s32 16, 16
          %492 = vsyncadd [#allocation21], %s491
          %s494 = sshll.u32 [#allocation20], 4
          %s495 = int_to_ptr.vmem [resolvable:$true] %s494
          %497 = dma.hbm_to_vmem [thread:$0]  %s11, 16, %s495, [#allocation21]
        $region52: #{tpu_custom_call.1} parent=11 // pred_fallthru
          _
        // Predicated region
        $region53: #{tpu_custom_call.1} parent=11 // pred_check
          %p498 = pneg %p318
        $region54: #{tpu_custom_call.1} parent=11 // pred_check_branch
          %500 = sbr.rel (%p498) target = $region56
        $region55: #{tpu_custom_call.1} parent=11 // pred_region
          %s502 = ssub.s32 16, 16
          %503 = vsyncadd [#allocation21], %s502
          %s505 = sshll.u32 [#allocation22], 4
          %s506 = int_to_ptr.vmem [resolvable:$true] %s505
          %508 = dma.hbm_to_vmem [thread:$0]  %s12, 16, %s506, [#allocation21]
        $region56: #{tpu_custom_call.1} parent=11 // pred_fallthru
          _
        // Predicated region
        $region57: #{tpu_custom_call.1} parent=11 // pred_check
          %p509 = pneg %p339
        $region58: #{tpu_custom_call.1} parent=11 // pred_check_branch
          %511 = sbr.rel (%p509) target = $region60
        $region59: #{tpu_custom_call.1} parent=11 // pred_region
          %s513 = ssub.s32 16, 16
          %514 = vsyncadd [#allocation24], %s513
          %s516 = sshll.u32 [#allocation23], 4
          %s517 = int_to_ptr.vmem [resolvable:$true] %s516
          %519 = dma.hbm_to_vmem [thread:$0]  %s13, 16, %s517, [#allocation24]
        $region60: #{tpu_custom_call.1} parent=11 // pred_fallthru
          _
      $region12: #{tpu_custom_call.1} parent=5 // pred_fallthru
        _
      %p520 = scmp.lt.s32.totalorder %s35, 2
      // Predicated region
      $region61: #{tpu_custom_call.1} parent=5 // pred_check
        %p521 = pneg %p520
      $region62: #{tpu_custom_call.1} parent=5 // pred_check_branch
        %523 = sbr.rel (%p521) target = $region64
      $region63: #{tpu_custom_call.1} parent=5 // pred_region
        // Predicated region
        $region65: #{tpu_custom_call.1} parent=63 // pred_check
          %p524 = pneg %p55
        $region66: #{tpu_custom_call.1} parent=63 // pred_check_branch
          %526 = sbr.rel (%p524) target = $region68
        $region67: #{tpu_custom_call.1} parent=63 // pred_region
          %s527 = sand.u32 %s45, 1
          %s528 = scalar_lea.sflag [#allocation3], %s527
          %s529 = sand.u32 %s45, 1
          %s530 = smul.addr %s529, 8
          %s531 = scalar_lea.vmem [#allocation2], %s530
          %s533 = ssub.s32 128, 128
          %534 = vsyncadd %s528, %s533
          %s535 = smul.addr %s35, 128
          %s536 = scalar_lea.hbm %s0, %s535
          %s538 = sshll.u32 %s531, 4
          %s539 = int_to_ptr.vmem [resolvable:$true] %s538
          %541 = dma.hbm_to_vmem [thread:$0]  %s536, 128, %s539, %s528
        $region68: #{tpu_custom_call.1} parent=63 // pred_fallthru
          _
        // Predicated region
        $region69: #{tpu_custom_call.1} parent=63 // pred_check
          %p542 = pneg %p81
        $region70: #{tpu_custom_call.1} parent=63 // pred_check_branch
          %544 = sbr.rel (%p542) target = $region72
        $region71: #{tpu_custom_call.1} parent=63 // pred_region
          %s545 = sand.u32 %s35, 1
          %s546 = scalar_lea.sflag [#allocation6], %s545
          %s547 = sand.u32 %s71, 1
          %s548 = scalar_lea.vmem [#allocation5], %s547
          %s550 = ssub.s32 16, 16
          %551 = vsyncadd %s546, %s550
          %s552 = smul.addr %s35, 16
          %s553 = scalar_lea.hbm %s1, %s552
          %s555 = sshll.u32 %s548, 4
          %s556 = int_to_ptr.vmem [resolvable:$true] %s555
          %558 = dma.hbm_to_vmem [thread:$0]  %s553, 16, %s556, %s546
        $region72: #{tpu_custom_call.1} parent=63 // pred_fallthru
          _
      $region64: #{tpu_custom_call.1} parent=5 // pred_fallthru
        _
      %p559 = scmp.le.s32.totalorder 1, %s35
      %p560 = scmp.lt.s32.totalorder %s35, 3
      %p561 = pnand %p559, %p560
      %p562 = pneg %p561
      // Predicated region
      $region73: #{tpu_custom_call.1} parent=5 // pred_check
        _
      $region74: #{tpu_custom_call.1} parent=5 // pred_check_branch
        %564 = sbr.rel (%p561) target = $region76
      $region75: #{tpu_custom_call.1} parent=5 // pred_region
        %s565 = ssub.s32 %s35, 1
        %s566 = sand.u32 %s48, 1
        %s567 = scalar_lea.sflag [#allocation3], %s566
        %s568 = sand.u32 %s48, 1
        %s569 = smul.addr %s568, 8
        %s570 = scalar_lea.vmem [#allocation2], %s569
        // Predicated region
        $region77: #{tpu_custom_call.1} parent=75 // pred_check
          %p571 = pneg %p61
        $region78: #{tpu_custom_call.1} parent=75 // pred_check_branch
          %573 = sbr.rel (%p571) target = $region80
        $region79: #{tpu_custom_call.1} parent=75 // pred_region
          %574 = dma.done %s567, 128
        $region80: #{tpu_custom_call.1} parent=75 // pred_fallthru
          _
        %s575 = sand.u32 %s40, 1
        %s576 = scalar_lea.sflag [#allocation6], %s575
        %s577 = sand.u32 %s74, 1
        %s578 = scalar_lea.vmem [#allocation5], %s577
        // Predicated region
        $region81: #{tpu_custom_call.1} parent=75 // pred_check
          %p579 = pneg %p87
        $region82: #{tpu_custom_call.1} parent=75 // pred_check_branch
          %581 = sbr.rel (%p579) target = $region84
        $region83: #{tpu_custom_call.1} parent=75 // pred_region
          %582 = dma.done %s576, 16
        $region84: #{tpu_custom_call.1} parent=75 // pred_fallthru
          _
        // Predicated region
        $region85: #{tpu_custom_call.1} parent=75 // pred_check
          %p583 = pneg %p108
        $region86: #{tpu_custom_call.1} parent=75 // pred_check_branch
          %585 = sbr.rel (%p583) target = $region88
        $region87: #{tpu_custom_call.1} parent=75 // pred_region
          %586 = dma.done [#allocation6], 16
        $region88: #{tpu_custom_call.1} parent=75 // pred_fallthru
          _
        // Predicated region
        $region89: #{tpu_custom_call.1} parent=75 // pred_check
          %p587 = pneg %p129
        $region90: #{tpu_custom_call.1} parent=75 // pred_check_branch
          %589 = sbr.rel (%p587) target = $region92
        $region91: #{tpu_custom_call.1} parent=75 // pred_region
          %590 = dma.done [#allocation9], 16
        $region92: #{tpu_custom_call.1} parent=75 // pred_fallthru
          _
        // Predicated region
        $region93: #{tpu_custom_call.1} parent=75 // pred_check
          %p591 = pneg %p150
        $region94: #{tpu_custom_call.1} parent=75 // pred_check_branch
          %593 = sbr.rel (%p591) target = $region96
        $region95: #{tpu_custom_call.1} parent=75 // pred_region
          %594 = dma.done [#allocation9], 256
        $region96: #{tpu_custom_call.1} parent=75 // pred_fallthru
          _
        // Predicated region
        $region97: #{tpu_custom_call.1} parent=75 // pred_check
          %p595 = pneg %p171
        $region98: #{tpu_custom_call.1} parent=75 // pred_check_branch
          %597 = sbr.rel (%p595) target = $region100
        $region99: #{tpu_custom_call.1} parent=75 // pred_region
          %598 = dma.done [#allocation12], 16
        $region100: #{tpu_custom_call.1} parent=75 // pred_fallthru
          _
        // Predicated region
        $region101: #{tpu_custom_call.1} parent=75 // pred_check
          %p599 = pneg %p192
        $region102: #{tpu_custom_call.1} parent=75 // pred_check_branch
          %601 = sbr.rel (%p599) target = $region104
        $region103: #{tpu_custom_call.1} parent=75 // pred_region
          %602 = dma.done [#allocation12], 256
        $region104: #{tpu_custom_call.1} parent=75 // pred_fallthru
          _
        // Predicated region
        $region105: #{tpu_custom_call.1} parent=75 // pred_check
          %p603 = pneg %p213
        $region106: #{tpu_custom_call.1} parent=75 // pred_check_branch
          %605 = sbr.rel (%p603) target = $region108
        $region107: #{tpu_custom_call.1} parent=75 // pred_region
          %606 = dma.done [#allocation15], 16
        $region108: #{tpu_custom_call.1} parent=75 // pred_fallthru
          _
        // Predicated region
        $region109: #{tpu_custom_call.1} parent=75 // pred_check
          %p607 = pneg %p234
        $region110: #{tpu_custom_call.1} parent=75 // pred_check_branch
          %609 = sbr.rel (%p607) target = $region112
        $region111: #{tpu_custom_call.1} parent=75 // pred_region
          %610 = dma.done [#allocation15], 256
        $region112: #{tpu_custom_call.1} parent=75 // pred_fallthru
          _
        // Predicated region
        $region113: #{tpu_custom_call.1} parent=75 // pred_check
          %p611 = pneg %p255
        $region114: #{tpu_custom_call.1} parent=75 // pred_check_branch
          %613 = sbr.rel (%p611) target = $region116
        $region115: #{tpu_custom_call.1} parent=75 // pred_region
          %614 = dma.done [#allocation18], 16
        $region116: #{tpu_custom_call.1} parent=75 // pred_fallthru
          _
        // Predicated region
        $region117: #{tpu_custom_call.1} parent=75 // pred_check
          %p615 = pneg %p276
        $region118: #{tpu_custom_call.1} parent=75 // pred_check_branch
          %617 = sbr.rel (%p615) target = $region120
        $region119: #{tpu_custom_call.1} parent=75 // pred_region
          %618 = dma.done [#allocation18], 256
        $region120: #{tpu_custom_call.1} parent=75 // pred_fallthru
          _
        // Predicated region
        $region121: #{tpu_custom_call.1} parent=75 // pred_check
          %p619 = pneg %p297
        $region122: #{tpu_custom_call.1} parent=75 // pred_check_branch
          %621 = sbr.rel (%p619) target = $region124
        $region123: #{tpu_custom_call.1} parent=75 // pred_region
          %622 = dma.done [#allocation21], 16
        $region124: #{tpu_custom_call.1} parent=75 // pred_fallthru
          _
        // Predicated region
        $region125: #{tpu_custom_call.1} parent=75 // pred_check
          %p623 = pneg %p318
        $region126: #{tpu_custom_call.1} parent=75 // pred_check_branch
          %625 = sbr.rel (%p623) target = $region128
        $region127: #{tpu_custom_call.1} parent=75 // pred_region
          %626 = dma.done [#allocation21], 16
        $region128: #{tpu_custom_call.1} parent=75 // pred_fallthru
          _
        // Predicated region
        $region129: #{tpu_custom_call.1} parent=75 // pred_check
          %p627 = pneg %p339
        $region130: #{tpu_custom_call.1} parent=75 // pred_check_branch
          %629 = sbr.rel (%p627) target = $region132
        $region131: #{tpu_custom_call.1} parent=75 // pred_region
          %630 = dma.done [#allocation24], 16
        $region132: #{tpu_custom_call.1} parent=75 // pred_fallthru
          _
        %s631 = sand.u32 %s48, 1
        %s632 = scalar_lea.sflag [#allocation3], %s631
        %s633 = sand.u32 %s48, 1
        %s634 = smul.addr %s633, 8
        %s635 = scalar_lea.vmem [#allocation2], %s634
        %p636 = pneg %p61
        %p637 = pneg %p58
        %s638 = sand.u32 %s40, 1
        %s639 = scalar_lea.sflag [#allocation6], %s638
        %s640 = sand.u32 %s74, 1
        %s641 = scalar_lea.vmem [#allocation5], %s640
        %p642 = pneg %p87
        %p643 = pneg %p84
        %p644 = pneg %p108
        %p645 = pneg %p105
        %p646 = pneg %p129
        %p647 = pneg %p126
        %p648 = pneg %p150
        %p649 = pneg %p147
        %p650 = pneg %p171
        %p651 = pneg %p168
        %p652 = pneg %p192
        %p653 = pneg %p189
        %p654 = pneg %p213
        %p655 = pneg %p210
        %p656 = pneg %p234
        %p657 = pneg %p231
        %p658 = pneg %p255
        %p659 = pneg %p252
        %p660 = pneg %p276
        %p661 = pneg %p273
        %p662 = pneg %p297
        %p663 = pneg %p294
        %p664 = pneg %p318
        %p665 = pneg %p315
        %p666 = pneg %p339
        %p667 = pneg %p336
        %p668 = pneg %p365
        %p669 = pneg %p362
        %s670 = sand.u32 %s352, 1
        %s671 = scalar_lea.sflag [#allocation4], %s670
        %s672 = sand.u32 %s352, 1
        %s673 = smul.addr %s672, 8
        %s674 = scalar_lea.vmem [#allocation25], %s673
        %v676 = vld [vmem:[%s570] sm:$0xff]
        %v677 = vld [vmem:[#allocation7] sm:$0x1]
        %v678 = vld [vmem:[#allocation8] sm:$0x1]
        %vm679 = vcmask 261120
        %v680 = vsel %vm679, %v676, 0.0
        %681 = vadd.xlane.f32.xlu0 %v680
        %v682 = vpop.xlane.xlu0 %681
        %v683 = vrcp.pop 32.0
        %v684 = vmul.f32 %v682, %v683
        %v685 = vsub.f32 %v676, %v684
        %v686 = vmul.f32 %v685, %v685
        %v687 = vsel %vm679, %v686, 0.0
        %688 = vadd.xlane.f32.xlu0 %v687
        %v689 = vpop.xlane.xlu0 %688
        %v690 = vmul.f32 %v689, %v683
        %v691 = vadd.f32 %v690, 1e-12
        %v692 = vrsqrt.pop %v691
        %v693 = vmul.f32 %v685, %v692
        %v695 = vlaneseq
        %v696 = vshrl.u32 %v695, 7
        %v697 = vsub.s32 0, %v696
        %v698 = vrot.slane %v677, %v697
        %v700 = vmul.f32 %v693, %v698
        %v702 = vlaneseq
        %v703 = vshrl.u32 %v702, 7
        %v704 = vsub.s32 0, %v703
        %v705 = vrot.slane %v678, %v704
        %v707 = vadd.f32 %v700, %v705
        %v708 = vpack.c.bf16 %v707, %v707
        %v709 = vld [vmem:[#allocation10] sm:$0xf]
        %v710 = vld [vmem:[#allocation10 + $0x4] sm:$0xf]
        %v711 = vld [vmem:[#allocation10 + $0x8] sm:$0xf]
        %v712 = vld [vmem:[#allocation10 + $0xc] sm:$0xf]
        %v713 = vld [vmem:[#allocation11] sm:$0x1]
        %v715 = vlaneseq
        %v716 = vshrl.u32 %v715, 7
        %v717 = vsub.s32 0, %v716
        %v718 = vrot.slane %v713, %v717
        %v724 = vunpack.c.l.b16 %v709
        %v725 = vunpack.c.l.b16 %v710
        %v726 = vunpack.c.l.b16 %v711
        %v727 = vunpack.c.l.b16 %v712
        %v728 = vpack.c.b16 %v725, %v724
        %v729 = vpack.c.b16 %v727, %v726
        %v733 = vsel %vm679, %v708, 0
        %735 = vmatprep.subr.bf16.mxu0 0
        %736 = vmatpush1.bf16.msra.mxu0 %v728
        %737 = vmatprep.subr.bf16.mxu0 0
        %738 = vmatpush1.bf16.msra.mxu0 %v729
        %739 = vmatprep.subr.bf16.mxu0 0
        %740 = vmatpush1.bf16.msra.mxu0 0
        %741 = vmatprep.subr.bf16.mxu0 0
        %742 = vmatpush1.bf16.msra.mxu0 0
        %743 = vmatprep.subr.bf16.mxu0 0
        %744 = vmatpush1.bf16.msra.mxu0 0
        %745 = vmatprep.subr.bf16.mxu0 0
        %746 = vmatpush1.bf16.msra.mxu0 0
        %747 = vmatprep.subr.bf16.mxu0 0
        %748 = vmatpush1.bf16.msra.mxu0 0
        %749 = vmatprep.subr.bf16.mxu0 0
        %750 = vmatpush1.bf16.msra.mxu0 0
        %751 = vmatprep.subr.bf16.mxu0 0
        %752 = vmatpush1.bf16.msra.mxu0 0
        %753 = vmatprep.subr.bf16.mxu0 0
        %754 = vmatpush1.bf16.msra.mxu0 0
        %755 = vmatprep.subr.bf16.mxu0 0
        %756 = vmatpush1.bf16.msra.mxu0 0
        %757 = vmatprep.subr.bf16.mxu0 0
        %758 = vmatpush1.bf16.msra.mxu0 0
        %759 = vmatprep.subr.bf16.mxu0 0
        %760 = vmatpush1.bf16.msra.mxu0 0
        %761 = vmatprep.subr.bf16.mxu0 0
        %762 = vmatpush1.bf16.msra.mxu0 0
        %763 = vmatprep.subr.bf16.mxu0 0
        %764 = vmatpush1.bf16.msra.mxu0 0
        %765 = vmatprep.subr.bf16.mxu0 0
        %766 = vmatpush1.bf16.msra.mxu0 0
        %767 = vmatprep.mubr.bf16.mxu0 0
        %768 = vmatmul.mubr.bf16.gmra.mrb[0].mxu0 %v733
        %v769 = vpop.f32.mrb[0].mxu0
        %v770 = vadd.f32 %v718, %v769
        %v771 = vpop.f32.mrb[0].mxu0
        %v772 = vpop.f32.mrb[0].mxu0
        %v773 = vpop.f32.mrb[0].mxu0
        %774 = vdwg.mxu0
        %v775 = vld [vmem:[#allocation13] sm:$0xf]
        %v776 = vld [vmem:[#allocation13 + $0x4] sm:$0xf]
        %v777 = vld [vmem:[#allocation13 + $0x8] sm:$0xf]
        %v778 = vld [vmem:[#allocation13 + $0xc] sm:$0xf]
        %v779 = vld [vmem:[#allocation14] sm:$0x1]
        %v781 = vlaneseq
        %v782 = vshrl.u32 %v781, 7
        %v783 = vsub.s32 0, %v782
        %v784 = vrot.slane %v779, %v783
        %v790 = vunpack.c.l.b16 %v775
        %v791 = vunpack.c.l.b16 %v776
        %v792 = vunpack.c.l.b16 %v777
        %v793 = vunpack.c.l.b16 %v778
        %v794 = vpack.c.b16 %v791, %v790
        %v795 = vpack.c.b16 %v793, %v792
        %798 = vmatprep.subr.bf16.mxu0 0
        %799 = vmatpush1.bf16.msra.mxu0 %v794
        %800 = vmatprep.subr.bf16.mxu0 0
        %801 = vmatpush1.bf16.msra.mxu0 %v795
        %802 = vmatprep.subr.bf16.mxu0 0
        %803 = vmatpush1.bf16.msra.mxu0 0
        %804 = vmatprep.subr.bf16.mxu0 0
        %805 = vmatpush1.bf16.msra.mxu0 0
        %806 = vmatprep.subr.bf16.mxu0 0
        %807 = vmatpush1.bf16.msra.mxu0 0
        %808 = vmatprep.subr.bf16.mxu0 0
        %809 = vmatpush1.bf16.msra.mxu0 0
        %810 = vmatprep.subr.bf16.mxu0 0
        %811 = vmatpush1.bf16.msra.mxu0 0
        %812 = vmatprep.subr.bf16.mxu0 0
        %813 = vmatpush1.bf16.msra.mxu0 0
        %814 = vmatprep.subr.bf16.mxu0 0
        %815 = vmatpush1.bf16.msra.mxu0 0
        %816 = vmatprep.subr.bf16.mxu0 0
        %817 = vmatpush1.bf16.msra.mxu0 0
        %818 = vmatprep.subr.bf16.mxu0 0
        %819 = vmatpush1.bf16.msra.mxu0 0
        %820 = vmatprep.subr.bf16.mxu0 0
        %821 = vmatpush1.bf16.msra.mxu0 0
        %822 = vmatprep.subr.bf16.mxu0 0
        %823 = vmatpush1.bf16.msra.mxu0 0
        %824 = vmatprep.subr.bf16.mxu0 0
        %825 = vmatpush1.bf16.msra.mxu0 0
        %826 = vmatprep.subr.bf16.mxu0 0
        %827 = vmatpush1.bf16.msra.mxu0 0
        %828 = vmatprep.subr.bf16.mxu0 0
        %829 = vmatpush1.bf16.msra.mxu0 0
        %830 = vmatprep.mubr.bf16.mxu0 0
        %831 = vmatmul.mubr.bf16.gmra.mrb[0].mxu0 %v733
        %v832 = vpop.f32.mrb[0].mxu0
        %v833 = vadd.f32 %v784, %v832
        %v834 = vpop.f32.mrb[0].mxu0
        %v835 = vpop.f32.mrb[0].mxu0
        %v836 = vpop.f32.mrb[0].mxu0
        %837 = vdwg.mxu0
        %v838 = vld [vmem:[#allocation16] sm:$0xf]
        %v839 = vld [vmem:[#allocation16 + $0x4] sm:$0xf]
        %v840 = vld [vmem:[#allocation16 + $0x8] sm:$0xf]
        %v841 = vld [vmem:[#allocation16 + $0xc] sm:$0xf]
        %v842 = vld [vmem:[#allocation17] sm:$0x1]
        %v844 = vlaneseq
        %v845 = vshrl.u32 %v844, 7
        %v846 = vsub.s32 0, %v845
        %v847 = vrot.slane %v842, %v846
        %v853 = vunpack.c.l.b16 %v838
        %v854 = vunpack.c.l.b16 %v839
        %v855 = vunpack.c.l.b16 %v840
        %v856 = vunpack.c.l.b16 %v841
        %v857 = vpack.c.b16 %v854, %v853
        %v858 = vpack.c.b16 %v856, %v855
        %861 = vmatprep.subr.bf16.mxu0 0
        %862 = vmatpush1.bf16.msra.mxu0 %v857
        %863 = vmatprep.subr.bf16.mxu0 0
        %864 = vmatpush1.bf16.msra.mxu0 %v858
        %865 = vmatprep.subr.bf16.mxu0 0
        %866 = vmatpush1.bf16.msra.mxu0 0
        %867 = vmatprep.subr.bf16.mxu0 0
        %868 = vmatpush1.bf16.msra.mxu0 0
        %869 = vmatprep.subr.bf16.mxu0 0
        %870 = vmatpush1.bf16.msra.mxu0 0
        %871 = vmatprep.subr.bf16.mxu0 0
        %872 = vmatpush1.bf16.msra.mxu0 0
        %873 = vmatprep.subr.bf16.mxu0 0
        %874 = vmatpush1.bf16.msra.mxu0 0
        %875 = vmatprep.subr.bf16.mxu0 0
        %876 = vmatpush1.bf16.msra.mxu0 0
        %877 = vmatprep.subr.bf16.mxu0 0
        %878 = vmatpush1.bf16.msra.mxu0 0
        %879 = vmatprep.subr.bf16.mxu0 0
        %880 = vmatpush1.bf16.msra.mxu0 0
        %881 = vmatprep.subr.bf16.mxu0 0
        %882 = vmatpush1.bf16.msra.mxu0 0
        %883 = vmatprep.subr.bf16.mxu0 0
        %884 = vmatpush1.bf16.msra.mxu0 0
        %885 = vmatprep.subr.bf16.mxu0 0
        %886 = vmatpush1.bf16.msra.mxu0 0
        %887 = vmatprep.subr.bf16.mxu0 0
        %888 = vmatpush1.bf16.msra.mxu0 0
        %889 = vmatprep.subr.bf16.mxu0 0
        %890 = vmatpush1.bf16.msra.mxu0 0
        %891 = vmatprep.subr.bf16.mxu0 0
        %892 = vmatpush1.bf16.msra.mxu0 0
        %893 = vmatprep.mubr.bf16.mxu0 0
        %894 = vmatmul.mubr.bf16.gmra.mrb[0].mxu0 %v733
        %v895 = vpop.f32.mrb[0].mxu0
        %v896 = vadd.f32 %v847, %v895
        %v897 = vpop.f32.mrb[0].mxu0
        %v898 = vpop.f32.mrb[0].mxu0
        %v899 = vpop.f32.mrb[0].mxu0
        %900 = vdwg.mxu0
        %v901 = vmul.f32 %v770, 0.35355338
        %903 = vrot.lane.b32.xlu0 %v901, 120
        %v904 = vpop.permute.xlu0 %903
        %906 = vrot.lane.b32.xlu0 %v901, 112
        %v907 = vpop.permute.xlu0 %906
        %909 = vrot.lane.b32.xlu0 %v901, 104
        %v910 = vpop.permute.xlu0 %909
        %v912 = vcombine.low %v901, %v907
        %v913 = vcombine.high %v901, %v907
        %v915 = vunpack.c.l.s4 1983009808
        %v916 = vunpack.c.0.s8 %v915
        %v917 = vlaneseq
        %v918 = vshrl.u32 %v917, 7
        %v919 = vsub.s32 %v916, %v918
        %v920 = vrot.slane %v912, %v919
        %v922 = vunpack.c.l.s4 1983009808
        %v923 = vunpack.c.0.s8 %v922
        %v924 = vlaneseq
        %v925 = vshrl.u32 %v924, 7
        %v926 = vsub.s32 %v923, %v925
        %v927 = vrot.slane %v913, %v926
        %v928 = vcombine.low %v904, %v910
        %v929 = vcombine.high %v904, %v910
        %v931 = vunpack.c.l.s4 1983009808
        %v932 = vunpack.c.0.s8 %v931
        %v933 = vlaneseq
        %v934 = vshrl.u32 %v933, 7
        %v935 = vsub.s32 %v932, %v934
        %v936 = vrot.slane %v928, %v935
        %v938 = vunpack.c.l.s4 1983009808
        %v939 = vunpack.c.0.s8 %v938
        %v940 = vlaneseq
        %v941 = vshrl.u32 %v940, 7
        %v942 = vsub.s32 %v939, %v941
        %v943 = vrot.slane %v929, %v942
        %v944 = vcombine.low %v920, %v936
        %v945 = vcombine.high %v920, %v936
        %v947 = vunpack.c.l.s4 1934713408
        %v948 = vunpack.c.0.s8 %v947
        %v949 = vlaneseq
        %v950 = vshrl.u32 %v949, 7
        %v951 = vsub.s32 %v948, %v950
        %v952 = vrot.slane %v944, %v951
        %v954 = vunpack.c.l.s4 1934713408
        %v955 = vunpack.c.0.s8 %v954
        %v956 = vlaneseq
        %v957 = vshrl.u32 %v956, 7
        %v958 = vsub.s32 %v955, %v957
        %v959 = vrot.slane %v945, %v958
        %v960 = vcombine.low %v927, %v943
        %v961 = vcombine.high %v927, %v943
        %v963 = vunpack.c.l.s4 1934713408
        %v964 = vunpack.c.0.s8 %v963
        %v965 = vlaneseq
        %v966 = vshrl.u32 %v965, 7
        %v967 = vsub.s32 %v964, %v966
        %v968 = vrot.slane %v960, %v967
        %v970 = vunpack.c.l.s4 1934713408
        %v971 = vunpack.c.0.s8 %v970
        %v972 = vlaneseq
        %v973 = vshrl.u32 %v972, 7
        %v974 = vsub.s32 %v971, %v973
        %v975 = vrot.slane %v961, %v974
        %v976 = vcombine.high %v952, 0.0
        %v977 = vcombine.high %v959, 0.0
        %v978 = vcombine.high %v968, 0.0
        %v979 = vcombine.high %v975, 0.0
        %v980 = vcombine.low %v952, %v959
        %v982 = vunpack.c.l.s4 1983009808
        %v983 = vunpack.c.0.s8 %v982
        %v984 = vlaneseq
        %v985 = vshrl.u32 %v984, 7
        %v986 = vsub.s32 %v983, %v985
        %v987 = vrot.slane %v980, %v986
        %v988 = vcombine.low %v976, %v977
        %v990 = vunpack.c.l.s4 1983009808
        %v991 = vunpack.c.0.s8 %v990
        %v992 = vlaneseq
        %v993 = vshrl.u32 %v992, 7
        %v994 = vsub.s32 %v991, %v993
        %v995 = vrot.slane %v988, %v994
        %v996 = vcombine.low %v968, %v975
        %v998 = vunpack.c.l.s4 1983009808
        %v999 = vunpack.c.0.s8 %v998
        %v1000 = vlaneseq
        %v1001 = vshrl.u32 %v1000, 7
        %v1002 = vsub.s32 %v999, %v1001
        %v1003 = vrot.slane %v996, %v1002
        %v1004 = vcombine.low %v978, %v979
        %v1006 = vunpack.c.l.s4 1983009808
        %v1007 = vunpack.c.0.s8 %v1006
        %v1008 = vlaneseq
        %v1009 = vshrl.u32 %v1008, 7
        %v1010 = vsub.s32 %v1007, %v1009
        %v1011 = vrot.slane %v1004, %v1010
        %v1012 = vcombine.low %v987, %v995
        %v1013 = vcombine.high %v987, %v995
        %v1015 = vunpack.c.l.s4 1934713408
        %v1016 = vunpack.c.0.s8 %v1015
        %v1017 = vlaneseq
        %v1018 = vshrl.u32 %v1017, 7
        %v1019 = vsub.s32 %v1016, %v1018
        %v1020 = vrot.slane %v1012, %v1019
        %v1022 = vunpack.c.l.s4 1934713408
        %v1023 = vunpack.c.0.s8 %v1022
        %v1024 = vlaneseq
        %v1025 = vshrl.u32 %v1024, 7
        %v1026 = vsub.s32 %v1023, %v1025
        %v1027 = vrot.slane %v1013, %v1026
        %v1028 = vcombine.low %v1003, %v1011
        %v1029 = vcombine.high %v1003, %v1011
        %v1031 = vunpack.c.l.s4 1934713408
        %v1032 = vunpack.c.0.s8 %v1031
        %v1033 = vlaneseq
        %v1034 = vshrl.u32 %v1033, 7
        %v1035 = vsub.s32 %v1032, %v1034
        %v1036 = vrot.slane %v1028, %v1035
        %v1038 = vunpack.c.l.s4 1934713408
        %v1039 = vunpack.c.0.s8 %v1038
        %v1040 = vlaneseq
        %v1041 = vshrl.u32 %v1040, 7
        %v1042 = vsub.s32 %v1039, %v1041
        %v1043 = vrot.slane %v1029, %v1042
        %v1044 = vcombine.low %v1020, %v1036
        %v1045 = vcombine.high %v1020, %v1036
        %v1046 = vcombine.low %v1027, %v1043
        %v1047 = vcombine.high %v1027, %v1043
        %v1048 = vpack.c.bf16 %v1044, %v1044
        %v1049 = vpack.c.bf16 %v1045, %v1045
        %v1050 = vpack.c.bf16 %v1046, %v1046
        %v1051 = vpack.c.bf16 %v1047, %v1047
        %1053 = vrot.lane.b32.xlu0 %v833, 120
        %v1054 = vpop.permute.xlu0 %1053
        %1056 = vrot.lane.b32.xlu0 %v833, 112
        %v1057 = vpop.permute.xlu0 %1056
        %1059 = vrot.lane.b32.xlu0 %v833, 104
        %v1060 = vpop.permute.xlu0 %1059
        %v1062 = vcombine.low %v833, %v1057
        %v1063 = vcombine.high %v833, %v1057
        %v1065 = vunpack.c.l.s4 1983009808
        %v1066 = vunpack.c.0.s8 %v1065
        %v1067 = vlaneseq
        %v1068 = vshrl.u32 %v1067, 7
        %v1069 = vsub.s32 %v1066, %v1068
        %v1070 = vrot.slane %v1062, %v1069
        %v1072 = vunpack.c.l.s4 1983009808
        %v1073 = vunpack.c.0.s8 %v1072
        %v1074 = vlaneseq
        %v1075 = vshrl.u32 %v1074, 7
        %v1076 = vsub.s32 %v1073, %v1075
        %v1077 = vrot.slane %v1063, %v1076
        %v1078 = vcombine.low %v1054, %v1060
        %v1079 = vcombine.high %v1054, %v1060
        %v1081 = vunpack.c.l.s4 1983009808
        %v1082 = vunpack.c.0.s8 %v1081
        %v1083 = vlaneseq
        %v1084 = vshrl.u32 %v1083, 7
        %v1085 = vsub.s32 %v1082, %v1084
        %v1086 = vrot.slane %v1078, %v1085
        %v1088 = vunpack.c.l.s4 1983009808
        %v1089 = vunpack.c.0.s8 %v1088
        %v1090 = vlaneseq
        %v1091 = vshrl.u32 %v1090, 7
        %v1092 = vsub.s32 %v1089, %v1091
        %v1093 = vrot.slane %v1079, %v1092
        %v1094 = vcombine.low %v1070, %v1086
        %v1095 = vcombine.high %v1070, %v1086
        %v1097 = vunpack.c.l.s4 1934713408
        %v1098 = vunpack.c.0.s8 %v1097
        %v1099 = vlaneseq
        %v1100 = vshrl.u32 %v1099, 7
        %v1101 = vsub.s32 %v1098, %v1100
        %v1102 = vrot.slane %v1094, %v1101
        %v1104 = vunpack.c.l.s4 1934713408
        %v1105 = vunpack.c.0.s8 %v1104
        %v1106 = vlaneseq
        %v1107 = vshrl.u32 %v1106, 7
        %v1108 = vsub.s32 %v1105, %v1107
        %v1109 = vrot.slane %v1095, %v1108
        %v1110 = vcombine.low %v1077, %v1093
        %v1111 = vcombine.high %v1077, %v1093
        %v1113 = vunpack.c.l.s4 1934713408
        %v1114 = vunpack.c.0.s8 %v1113
        %v1115 = vlaneseq
        %v1116 = vshrl.u32 %v1115, 7
        %v1117 = vsub.s32 %v1114, %v1116
        %v1118 = vrot.slane %v1110, %v1117
        %v1120 = vunpack.c.l.s4 1934713408
        %v1121 = vunpack.c.0.s8 %v1120
        %v1122 = vlaneseq
        %v1123 = vshrl.u32 %v1122, 7
        %v1124 = vsub.s32 %v1121, %v1123
        %v1125 = vrot.slane %v1111, %v1124
        %v1126 = vcombine.high %v1102, 0.0
        %v1127 = vcombine.high %v1109, 0.0
        %v1128 = vcombine.high %v1118, 0.0
        %v1129 = vcombine.high %v1125, 0.0
        %v1130 = vcombine.low %v1102, %v1109
        %v1132 = vunpack.c.l.s4 1983009808
        %v1133 = vunpack.c.0.s8 %v1132
        %v1134 = vlaneseq
        %v1135 = vshrl.u32 %v1134, 7
        %v1136 = vsub.s32 %v1133, %v1135
        %v1137 = vrot.slane %v1130, %v1136
        %v1138 = vcombine.low %v1126, %v1127
        %v1140 = vunpack.c.l.s4 1983009808
        %v1141 = vunpack.c.0.s8 %v1140
        %v1142 = vlaneseq
        %v1143 = vshrl.u32 %v1142, 7
        %v1144 = vsub.s32 %v1141, %v1143
        %v1145 = vrot.slane %v1138, %v1144
        %v1146 = vcombine.low %v1118, %v1125
        %v1148 = vunpack.c.l.s4 1983009808
        %v1149 = vunpack.c.0.s8 %v1148
        %v1150 = vlaneseq
        %v1151 = vshrl.u32 %v1150, 7
        %v1152 = vsub.s32 %v1149, %v1151
        %v1153 = vrot.slane %v1146, %v1152
        %v1154 = vcombine.low %v1128, %v1129
        %v1156 = vunpack.c.l.s4 1983009808
        %v1157 = vunpack.c.0.s8 %v1156
        %v1158 = vlaneseq
        %v1159 = vshrl.u32 %v1158, 7
        %v1160 = vsub.s32 %v1157, %v1159
        %v1161 = vrot.slane %v1154, %v1160
        %v1162 = vcombine.low %v1137, %v1145
        %v1163 = vcombine.high %v1137, %v1145
        %v1165 = vunpack.c.l.s4 1934713408
        %v1166 = vunpack.c.0.s8 %v1165
        %v1167 = vlaneseq
        %v1168 = vshrl.u32 %v1167, 7
        %v1169 = vsub.s32 %v1166, %v1168
        %v1170 = vrot.slane %v1162, %v1169
        %v1172 = vunpack.c.l.s4 1934713408
        %v1173 = vunpack.c.0.s8 %v1172
        %v1174 = vlaneseq
        %v1175 = vshrl.u32 %v1174, 7
        %v1176 = vsub.s32 %v1173, %v1175
        %v1177 = vrot.slane %v1163, %v1176
        %v1178 = vcombine.low %v1153, %v1161
        %v1179 = vcombine.high %v1153, %v1161
        %v1181 = vunpack.c.l.s4 1934713408
        %v1182 = vunpack.c.0.s8 %v1181
        %v1183 = vlaneseq
        %v1184 = vshrl.u32 %v1183, 7
        %v1185 = vsub.s32 %v1182, %v1184
        %v1186 = vrot.slane %v1178, %v1185
        %v1188 = vunpack.c.l.s4 1934713408
        %v1189 = vunpack.c.0.s8 %v1188
        %v1190 = vlaneseq
        %v1191 = vshrl.u32 %v1190, 7
        %v1192 = vsub.s32 %v1189, %v1191
        %v1193 = vrot.slane %v1179, %v1192
        %v1194 = vcombine.low %v1170, %v1186
        %v1195 = vcombine.high %v1170, %v1186
        %v1196 = vcombine.low %v1177, %v1193
        %v1197 = vcombine.high %v1177, %v1193
        %v1198 = vpack.c.bf16 %v1194, %v1194
        %v1199 = vpack.c.bf16 %v1195, %v1195
        %v1200 = vpack.c.bf16 %v1196, %v1196
        %v1201 = vpack.c.bf16 %v1197, %v1197
        %1203 = vrot.lane.b32.xlu0 %v896, 120
        %v1204 = vpop.permute.xlu0 %1203
        %1206 = vrot.lane.b32.xlu0 %v896, 112
        %v1207 = vpop.permute.xlu0 %1206
        %1209 = vrot.lane.b32.xlu0 %v896, 104
        %v1210 = vpop.permute.xlu0 %1209
        %v1212 = vcombine.low %v896, %v1207
        %v1213 = vcombine.high %v896, %v1207
        %v1215 = vunpack.c.l.s4 1983009808
        %v1216 = vunpack.c.0.s8 %v1215
        %v1217 = vlaneseq
        %v1218 = vshrl.u32 %v1217, 7
        %v1219 = vsub.s32 %v1216, %v1218
        %v1220 = vrot.slane %v1212, %v1219
        %v1222 = vunpack.c.l.s4 1983009808
        %v1223 = vunpack.c.0.s8 %v1222
        %v1224 = vlaneseq
        %v1225 = vshrl.u32 %v1224, 7
        %v1226 = vsub.s32 %v1223, %v1225
        %v1227 = vrot.slane %v1213, %v1226
        %v1228 = vcombine.low %v1204, %v1210
        %v1229 = vcombine.high %v1204, %v1210
        %v1231 = vunpack.c.l.s4 1983009808
        %v1232 = vunpack.c.0.s8 %v1231
        %v1233 = vlaneseq
        %v1234 = vshrl.u32 %v1233, 7
        %v1235 = vsub.s32 %v1232, %v1234
        %v1236 = vrot.slane %v1228, %v1235
        %v1238 = vunpack.c.l.s4 1983009808
        %v1239 = vunpack.c.0.s8 %v1238
        %v1240 = vlaneseq
        %v1241 = vshrl.u32 %v1240, 7
        %v1242 = vsub.s32 %v1239, %v1241
        %v1243 = vrot.slane %v1229, %v1242
        %v1244 = vcombine.low %v1220, %v1236
        %v1245 = vcombine.high %v1220, %v1236
        %v1247 = vunpack.c.l.s4 1934713408
        %v1248 = vunpack.c.0.s8 %v1247
        %v1249 = vlaneseq
        %v1250 = vshrl.u32 %v1249, 7
        %v1251 = vsub.s32 %v1248, %v1250
        %v1252 = vrot.slane %v1244, %v1251
        %v1254 = vunpack.c.l.s4 1934713408
        %v1255 = vunpack.c.0.s8 %v1254
        %v1256 = vlaneseq
        %v1257 = vshrl.u32 %v1256, 7
        %v1258 = vsub.s32 %v1255, %v1257
        %v1259 = vrot.slane %v1245, %v1258
        %v1260 = vcombine.low %v1227, %v1243
        %v1261 = vcombine.high %v1227, %v1243
        %v1263 = vunpack.c.l.s4 1934713408
        %v1264 = vunpack.c.0.s8 %v1263
        %v1265 = vlaneseq
        %v1266 = vshrl.u32 %v1265, 7
        %v1267 = vsub.s32 %v1264, %v1266
        %v1268 = vrot.slane %v1260, %v1267
        %v1270 = vunpack.c.l.s4 1934713408
        %v1271 = vunpack.c.0.s8 %v1270
        %v1272 = vlaneseq
        %v1273 = vshrl.u32 %v1272, 7
        %v1274 = vsub.s32 %v1271, %v1273
        %v1275 = vrot.slane %v1261, %v1274
        %v1276 = vcombine.high %v1252, 0.0
        %v1277 = vcombine.high %v1259, 0.0
        %v1278 = vcombine.high %v1268, 0.0
        %v1279 = vcombine.high %v1275, 0.0
        %v1280 = vcombine.low %v1252, %v1259
        %v1282 = vunpack.c.l.s4 1983009808
        %v1283 = vunpack.c.0.s8 %v1282
        %v1284 = vlaneseq
        %v1285 = vshrl.u32 %v1284, 7
        %v1286 = vsub.s32 %v1283, %v1285
        %v1287 = vrot.slane %v1280, %v1286
        %v1288 = vcombine.low %v1276, %v1277
        %v1290 = vunpack.c.l.s4 1983009808
        %v1291 = vunpack.c.0.s8 %v1290
        %v1292 = vlaneseq
        %v1293 = vshrl.u32 %v1292, 7
        %v1294 = vsub.s32 %v1291, %v1293
        %v1295 = vrot.slane %v1288, %v1294
        %v1296 = vcombine.low %v1268, %v1275
        %v1298 = vunpack.c.l.s4 1983009808
        %v1299 = vunpack.c.0.s8 %v1298
        %v1300 = vlaneseq
        %v1301 = vshrl.u32 %v1300, 7
        %v1302 = vsub.s32 %v1299, %v1301
        %v1303 = vrot.slane %v1296, %v1302
        %v1304 = vcombine.low %v1278, %v1279
        %v1306 = vunpack.c.l.s4 1983009808
        %v1307 = vunpack.c.0.s8 %v1306
        %v1308 = vlaneseq
        %v1309 = vshrl.u32 %v1308, 7
        %v1310 = vsub.s32 %v1307, %v1309
        %v1311 = vrot.slane %v1304, %v1310
        %v1312 = vcombine.low %v1287, %v1295
        %v1313 = vcombine.high %v1287, %v1295
        %v1315 = vunpack.c.l.s4 1934713408
        %v1316 = vunpack.c.0.s8 %v1315
        %v1317 = vlaneseq
        %v1318 = vshrl.u32 %v1317, 7
        %v1319 = vsub.s32 %v1316, %v1318
        %v1320 = vrot.slane %v1312, %v1319
        %v1322 = vunpack.c.l.s4 1934713408
        %v1323 = vunpack.c.0.s8 %v1322
        %v1324 = vlaneseq
        %v1325 = vshrl.u32 %v1324, 7
        %v1326 = vsub.s32 %v1323, %v1325
        %v1327 = vrot.slane %v1313, %v1326
        %v1328 = vcombine.low %v1303, %v1311
        %v1329 = vcombine.high %v1303, %v1311
        %v1331 = vunpack.c.l.s4 1934713408
        %v1332 = vunpack.c.0.s8 %v1331
        %v1333 = vlaneseq
        %v1334 = vshrl.u32 %v1333, 7
        %v1335 = vsub.s32 %v1332, %v1334
        %v1336 = vrot.slane %v1328, %v1335
        %v1338 = vunpack.c.l.s4 1934713408
        %v1339 = vunpack.c.0.s8 %v1338
        %v1340 = vlaneseq
        %v1341 = vshrl.u32 %v1340, 7
        %v1342 = vsub.s32 %v1339, %v1341
        %v1343 = vrot.slane %v1329, %v1342
        %v1344 = vcombine.low %v1320, %v1336
        %v1345 = vcombine.high %v1320, %v1336
        %v1346 = vcombine.low %v1327, %v1343
        %v1347 = vcombine.high %v1327, %v1343
        %v1348 = vpack.c.bf16 %v1344, %v1344
        %v1349 = vpack.c.bf16 %v1345, %v1345
        %v1350 = vpack.c.bf16 %v1346, %v1346
        %v1351 = vpack.c.bf16 %v1347, %v1347
        %v1352 = vld [vmem:[%s578] sm:$0x1]
        %v1353 = vsub.f32 1.0, %v1352
        %v1354 = vmul.f32 %v1353, -10000.0
        %v1356 = vlaneseq
        %v1357 = vshrl.u32 %v1356, 7
        %v1358 = vsub.s32 0, %v1357
        %v1359 = vrot.slane %v1354, %v1358
        %vm1361 = vcmask 64512
        %v1363 = vsel %vm1361, %v1048, 0
        %v1366 = vsel %vm1361, %v1198, 0
        %1368 = vmatprep.subr.bf16.mxu0 0
        %1369 = vmatpush1.bf16.xpose.msra.mxu0 %v1366
        %1370 = vmatprep.subr.bf16.mxu0 0
        %1371 = vmatpush1.bf16.xpose.msra.mxu0 0
        %1372 = vmatprep.subr.bf16.mxu0 0
        %1373 = vmatpush1.bf16.xpose.msra.mxu0 0
        %1374 = vmatprep.subr.bf16.mxu0 0
        %1375 = vmatpush1.bf16.xpose.msra.mxu0 0
        %1376 = vmatprep.subr.bf16.mxu0 0
        %1377 = vmatpush1.bf16.xpose.msra.mxu0 0
        %1378 = vmatprep.subr.bf16.mxu0 0
        %1379 = vmatpush1.bf16.xpose.msra.mxu0 0
        %1380 = vmatprep.subr.bf16.mxu0 0
        %1381 = vmatpush1.bf16.xpose.msra.mxu0 0
        %1382 = vmatprep.subr.bf16.mxu0 0
        %1383 = vmatpush1.bf16.xpose.msra.mxu0 0
        %1384 = vmatprep.subr.bf16.mxu0 0
        %1385 = vmatpush1.bf16.xpose.msra.mxu0 0
        %1386 = vmatprep.subr.bf16.mxu0 0
        %1387 = vmatpush1.bf16.xpose.msra.mxu0 0
        %1388 = vmatprep.subr.bf16.mxu0 0
        %1389 = vmatpush1.bf16.xpose.msra.mxu0 0
        %1390 = vmatprep.subr.bf16.mxu0 0
        %1391 = vmatpush1.bf16.xpose.msra.mxu0 0
        %1392 = vmatprep.subr.bf16.mxu0 0
        %1393 = vmatpush1.bf16.xpose.msra.mxu0 0
        %1394 = vmatprep.subr.bf16.mxu0 0
        %1395 = vmatpush1.bf16.xpose.msra.mxu0 0
        %1396 = vmatprep.subr.bf16.mxu0 0
        %1397 = vmatpush1.bf16.xpose.msra.mxu0 0
        %1398 = vmatprep.subr.bf16.mxu0 0
        %1399 = vmatpush1.bf16.xpose.msra.mxu0 0
        %1400 = vmatprep.mubr.bf16.mxu0 0
        %1401 = vmatmul.mubr.bf16.gmra.mrb[0].mxu0 %v1363
        %v1402 = vpop.f32.mrb[0].mxu0
        %v1403 = vadd.f32 %v1359, %v1402
        %v1404 = vpop.f32.mrb[0].mxu0
        %v1405 = vpop.f32.mrb[0].mxu0
        %v1406 = vpop.f32.mrb[0].mxu0
        %1407 = vdwg.mxu0
        %v1409 = vsel %vm1361, %v1049, 0
        %v1412 = vsel %vm1361, %v1199, 0
        %1414 = vmatprep.subr.bf16.mxu0 0
        %1415 = vmatpush1.bf16.xpose.msra.mxu0 %v1412
        %1416 = vmatprep.subr.bf16.mxu0 0
        %1417 = vmatpush1.bf16.xpose.msra.mxu0 0
        %1418 = vmatprep.subr.bf16.mxu0 0
        %1419 = vmatpush1.bf16.xpose.msra.mxu0 0
        %1420 = vmatprep.subr.bf16.mxu0 0
        %1421 = vmatpush1.bf16.xpose.msra.mxu0 0
        %1422 = vmatprep.subr.bf16.mxu0 0
        %1423 = vmatpush1.bf16.xpose.msra.mxu0 0
        %1424 = vmatprep.subr.bf16.mxu0 0
        %1425 = vmatpush1.bf16.xpose.msra.mxu0 0
        %1426 = vmatprep.subr.bf16.mxu0 0
        %1427 = vmatpush1.bf16.xpose.msra.mxu0 0
        %1428 = vmatprep.subr.bf16.mxu0 0
        %1429 = vmatpush1.bf16.xpose.msra.mxu0 0
        %1430 = vmatprep.subr.bf16.mxu0 0
        %1431 = vmatpush1.bf16.xpose.msra.mxu0 0
        %1432 = vmatprep.subr.bf16.mxu0 0
        %1433 = vmatpush1.bf16.xpose.msra.mxu0 0
        %1434 = vmatprep.subr.bf16.mxu0 0
        %1435 = vmatpush1.bf16.xpose.msra.mxu0 0
        %1436 = vmatprep.subr.bf16.mxu0 0
        %1437 = vmatpush1.bf16.xpose.msra.mxu0 0
        %1438 = vmatprep.subr.bf16.mxu0 0
        %1439 = vmatpush1.bf16.xpose.msra.mxu0 0
        %1440 = vmatprep.subr.bf16.mxu0 0
        %1441 = vmatpush1.bf16.xpose.msra.mxu0 0
        %1442 = vmatprep.subr.bf16.mxu0 0
        %1443 = vmatpush1.bf16.xpose.msra.mxu0 0
        %1444 = vmatprep.subr.bf16.mxu0 0
        %1445 = vmatpush1.bf16.xpose.msra.mxu0 0
        %1446 = vmatprep.mubr.bf16.mxu0 0
        %1447 = vmatmul.mubr.bf16.gmra.mrb[0].mxu0 %v1409
        %v1448 = vpop.f32.mrb[0].mxu0
        %v1449 = vadd.f32 %v1359, %v1448
        %v1450 = vpop.f32.mrb[0].mxu0
        %v1451 = vpop.f32.mrb[0].mxu0
        %v1452 = vpop.f32.mrb[0].mxu0
        %1453 = vdwg.mxu0
        %v1455 = vsel %vm1361, %v1050, 0
        %v1458 = vsel %vm1361, %v1200, 0
        %1460 = vmatprep.subr.bf16.mxu0 0
        %1461 = vmatpush1.bf16.xpose.msra.mxu0 %v1458
        %1462 = vmatprep.subr.bf16.mxu0 0
        %1463 = vmatpush1.bf16.xpose.msra.mxu0 0
        %1464 = vmatprep.subr.bf16.mxu0 0
        %1465 = vmatpush1.bf16.xpose.msra.mxu0 0
        %1466 = vmatprep.subr.bf16.mxu0 0
        %1467 = vmatpush1.bf16.xpose.msra.mxu0 0
        %1468 = vmatprep.subr.bf16.mxu0 0
        %1469 = vmatpush1.bf16.xpose.msra.mxu0 0
        %1470 = vmatprep.subr.bf16.mxu0 0
        %1471 = vmatpush1.bf16.xpose.msra.mxu0 0
        %1472 = vmatprep.subr.bf16.mxu0 0
        %1473 = vmatpush1.bf16.xpose.msra.mxu0 0
        %1474 = vmatprep.subr.bf16.mxu0 0
        %1475 = vmatpush1.bf16.xpose.msra.mxu0 0
        %1476 = vmatprep.subr.bf16.mxu0 0
        %1477 = vmatpush1.bf16.xpose.msra.mxu0 0
        %1478 = vmatprep.subr.bf16.mxu0 0
        %1479 = vmatpush1.bf16.xpose.msra.mxu0 0
        %1480 = vmatprep.subr.bf16.mxu0 0
        %1481 = vmatpush1.bf16.xpose.msra.mxu0 0
        %1482 = vmatprep.subr.bf16.mxu0 0
        %1483 = vmatpush1.bf16.xpose.msra.mxu0 0
        %1484 = vmatprep.subr.bf16.mxu0 0
        %1485 = vmatpush1.bf16.xpose.msra.mxu0 0
        %1486 = vmatprep.subr.bf16.mxu0 0
        %1487 = vmatpush1.bf16.xpose.msra.mxu0 0
        %1488 = vmatprep.subr.bf16.mxu0 0
        %1489 = vmatpush1.bf16.xpose.msra.mxu0 0
        %1490 = vmatprep.subr.bf16.mxu0 0
        %1491 = vmatpush1.bf16.xpose.msra.mxu0 0
        %1492 = vmatprep.mubr.bf16.mxu0 0
        %1493 = vmatmul.mubr.bf16.gmra.mrb[0].mxu0 %v1455
        %v1494 = vpop.f32.mrb[0].mxu0
        %v1495 = vadd.f32 %v1359, %v1494
        %v1496 = vpop.f32.mrb[0].mxu0
        %v1497 = vpop.f32.mrb[0].mxu0
        %v1498 = vpop.f32.mrb[0].mxu0
        %1499 = vdwg.mxu0
        %v1501 = vsel %vm1361, %v1051, 0
        %v1504 = vsel %vm1361, %v1201, 0
        %1506 = vmatprep.subr.bf16.mxu0 0
        %1507 = vmatpush1.bf16.xpose.msra.mxu0 %v1504
        %1508 = vmatprep.subr.bf16.mxu0 0
        %1509 = vmatpush1.bf16.xpose.msra.mxu0 0
        %1510 = vmatprep.subr.bf16.mxu0 0
        %1511 = vmatpush1.bf16.xpose.msra.mxu0 0
        %1512 = vmatprep.subr.bf16.mxu0 0
        %1513 = vmatpush1.bf16.xpose.msra.mxu0 0
        %1514 = vmatprep.subr.bf16.mxu0 0
        %1515 = vmatpush1.bf16.xpose.msra.mxu0 0
        %1516 = vmatprep.subr.bf16.mxu0 0
        %1517 = vmatpush1.bf16.xpose.msra.mxu0 0
        %1518 = vmatprep.subr.bf16.mxu0 0
        %1519 = vmatpush1.bf16.xpose.msra.mxu0 0
        %1520 = vmatprep.subr.bf16.mxu0 0
        %1521 = vmatpush1.bf16.xpose.msra.mxu0 0
        %1522 = vmatprep.subr.bf16.mxu0 0
        %1523 = vmatpush1.bf16.xpose.msra.mxu0 0
        %1524 = vmatprep.subr.bf16.mxu0 0
        %1525 = vmatpush1.bf16.xpose.msra.mxu0 0
        %1526 = vmatprep.subr.bf16.mxu0 0
        %1527 = vmatpush1.bf16.xpose.msra.mxu0 0
        %1528 = vmatprep.subr.bf16.mxu0 0
        %1529 = vmatpush1.bf16.xpose.msra.mxu0 0
        %1530 = vmatprep.subr.bf16.mxu0 0
        %1531 = vmatpush1.bf16.xpose.msra.mxu0 0
        %1532 = vmatprep.subr.bf16.mxu0 0
        %1533 = vmatpush1.bf16.xpose.msra.mxu0 0
        %1534 = vmatprep.subr.bf16.mxu0 0
        %1535 = vmatpush1.bf16.xpose.msra.mxu0 0
        %1536 = vmatprep.subr.bf16.mxu0 0
        %1537 = vmatpush1.bf16.xpose.msra.mxu0 0
        %1538 = vmatprep.mubr.bf16.mxu0 0
        %1539 = vmatmul.mubr.bf16.gmra.mrb[0].mxu0 %v1501
        %v1540 = vpop.f32.mrb[0].mxu0
        %v1541 = vadd.f32 %v1359, %v1540
        %v1542 = vpop.f32.mrb[0].mxu0
        %v1543 = vpop.f32.mrb[0].mxu0
        %v1544 = vpop.f32.mrb[0].mxu0
        %1545 = vdwg.mxu0
        %v1546 = vsel %vm1361, %v1403, -inf
        %1547 = vmax.xlane.f32.xlu0 %v1546
        %v1548 = vpop.xlane.xlu0 %1547
        %v1549 = vsel %vm1361, %v1449, -inf
        %1550 = vmax.xlane.f32.xlu0 %v1549
        %v1551 = vpop.xlane.xlu0 %1550
        %v1552 = vsel %vm1361, %v1495, -inf
        %1553 = vmax.xlane.f32.xlu0 %v1552
        %v1554 = vpop.xlane.xlu0 %1553
        %v1555 = vsel %vm1361, %v1541, -inf
        %1556 = vmax.xlane.f32.xlu0 %v1555
        %v1557 = vpop.xlane.xlu0 %1556
        %v1558 = vsub.f32 %v1403, %v1548
        %v1559 = vsub.f32 %v1449, %v1551
        %v1560 = vsub.f32 %v1495, %v1554
        %v1561 = vsub.f32 %v1541, %v1557
        %v1562 = vmul.f32 %v1558, 1.442695
        %v1563 = vpow.pop %v1562
        %v1564 = vmul.f32 %v1559, 1.442695
        %v1565 = vpow.pop %v1564
        %v1566 = vmul.f32 %v1560, 1.442695
        %v1567 = vpow.pop %v1566
        %v1568 = vmul.f32 %v1561, 1.442695
        %v1569 = vpow.pop %v1568
        %v1570 = vsel %vm1361, %v1563, 0.0
        %1571 = vadd.xlane.f32.xlu0 %v1570
        %v1572 = vpop.xlane.xlu0 %1571
        %v1573 = vsel %vm1361, %v1565, 0.0
        %1574 = vadd.xlane.f32.xlu0 %v1573
        %v1575 = vpop.xlane.xlu0 %1574
        %v1576 = vsel %vm1361, %v1567, 0.0
        %1577 = vadd.xlane.f32.xlu0 %v1576
        %v1578 = vpop.xlane.xlu0 %1577
        %v1579 = vsel %vm1361, %v1569, 0.0
        %1580 = vadd.xlane.f32.xlu0 %v1579
        %v1581 = vpop.xlane.xlu0 %1580
        %v1582 = vrcp.pop %v1572
        %v1583 = vrcp.pop %v1575
        %v1584 = vrcp.pop %v1578
        %v1585 = vrcp.pop %v1581
        %v1586 = vmul.f32 %v1563, %v1582
        %v1587 = vmul.f32 %v1565, %v1583
        %v1588 = vmul.f32 %v1567, %v1584
        %v1589 = vmul.f32 %v1569, %v1585
        %v1590 = vpack.c.bf16 %v1586, %v1586
        %v1591 = vpack.c.bf16 %v1587, %v1587
        %v1592 = vpack.c.bf16 %v1588, %v1588
        %v1593 = vpack.c.bf16 %v1589, %v1589
        %v1595 = vsel %vm1361, %v1590, 0
        %vm1597 = vcmask 1043456
        %v1599 = vsel %vm1597, %v1348, 0
        %1601 = vmatprep.subr.bf16.mxu0 0
        %1602 = vmatpush1.bf16.msra.mxu0 %v1599
        %1603 = vmatprep.subr.bf16.mxu0 0
        %1604 = vmatpush1.bf16.msra.mxu0 0
        %1605 = vmatprep.subr.bf16.mxu0 0
        %1606 = vmatpush1.bf16.msra.mxu0 0
        %1607 = vmatprep.subr.bf16.mxu0 0
        %1608 = vmatpush1.bf16.msra.mxu0 0
        %1609 = vmatprep.subr.bf16.mxu0 0
        %1610 = vmatpush1.bf16.msra.mxu0 0
        %1611 = vmatprep.subr.bf16.mxu0 0
        %1612 = vmatpush1.bf16.msra.mxu0 0
        %1613 = vmatprep.subr.bf16.mxu0 0
        %1614 = vmatpush1.bf16.msra.mxu0 0
        %1615 = vmatprep.subr.bf16.mxu0 0
        %1616 = vmatpush1.bf16.msra.mxu0 0
        %1617 = vmatprep.subr.bf16.mxu0 0
        %1618 = vmatpush1.bf16.msra.mxu0 0
        %1619 = vmatprep.subr.bf16.mxu0 0
        %1620 = vmatpush1.bf16.msra.mxu0 0
        %1621 = vmatprep.subr.bf16.mxu0 0
        %1622 = vmatpush1.bf16.msra.mxu0 0
        %1623 = vmatprep.subr.bf16.mxu0 0
        %1624 = vmatpush1.bf16.msra.mxu0 0
        %1625 = vmatprep.subr.bf16.mxu0 0
        %1626 = vmatpush1.bf16.msra.mxu0 0
        %1627 = vmatprep.subr.bf16.mxu0 0
        %1628 = vmatpush1.bf16.msra.mxu0 0
        %1629 = vmatprep.subr.bf16.mxu0 0
        %1630 = vmatpush1.bf16.msra.mxu0 0
        %1631 = vmatprep.subr.bf16.mxu0 0
        %1632 = vmatpush1.bf16.msra.mxu0 0
        %1633 = vmatprep.mubr.bf16.mxu0 0
        %1634 = vmatmul.mubr.bf16.gmra.mrb[0].mxu0 %v1595
        %v1635 = vpop.f32.mrb[0].mxu0
        %v1636 = vadd.f32 0.0, %v1635
        %v1637 = vpop.f32.mrb[0].mxu0
        %v1638 = vpop.f32.mrb[0].mxu0
        %v1639 = vpop.f32.mrb[0].mxu0
        %1640 = vdwg.mxu0
        %v1642 = vsel %vm1361, %v1591, 0
        %v1645 = vsel %vm1597, %v1349, 0
        %1647 = vmatprep.subr.bf16.mxu0 0
        %1648 = vmatpush1.bf16.msra.mxu0 %v1645
        %1649 = vmatprep.subr.bf16.mxu0 0
        %1650 = vmatpush1.bf16.msra.mxu0 0
        %1651 = vmatprep.subr.bf16.mxu0 0
        %1652 = vmatpush1.bf16.msra.mxu0 0
        %1653 = vmatprep.subr.bf16.mxu0 0
        %1654 = vmatpush1.bf16.msra.mxu0 0
        %1655 = vmatprep.subr.bf16.mxu0 0
        %1656 = vmatpush1.bf16.msra.mxu0 0
        %1657 = vmatprep.subr.bf16.mxu0 0
        %1658 = vmatpush1.bf16.msra.mxu0 0
        %1659 = vmatprep.subr.bf16.mxu0 0
        %1660 = vmatpush1.bf16.msra.mxu0 0
        %1661 = vmatprep.subr.bf16.mxu0 0
        %1662 = vmatpush1.bf16.msra.mxu0 0
        %1663 = vmatprep.subr.bf16.mxu0 0
        %1664 = vmatpush1.bf16.msra.mxu0 0
        %1665 = vmatprep.subr.bf16.mxu0 0
        %1666 = vmatpush1.bf16.msra.mxu0 0
        %1667 = vmatprep.subr.bf16.mxu0 0
        %1668 = vmatpush1.bf16.msra.mxu0 0
        %1669 = vmatprep.subr.bf16.mxu0 0
        %1670 = vmatpush1.bf16.msra.mxu0 0
        %1671 = vmatprep.subr.bf16.mxu0 0
        %1672 = vmatpush1.bf16.msra.mxu0 0
        %1673 = vmatprep.subr.bf16.mxu0 0
        %1674 = vmatpush1.bf16.msra.mxu0 0
        %1675 = vmatprep.subr.bf16.mxu0 0
        %1676 = vmatpush1.bf16.msra.mxu0 0
        %1677 = vmatprep.subr.bf16.mxu0 0
        %1678 = vmatpush1.bf16.msra.mxu0 0
        %1679 = vmatprep.mubr.bf16.mxu0 0
        %1680 = vmatmul.mubr.bf16.gmra.mrb[0].mxu0 %v1642
        %v1681 = vpop.f32.mrb[0].mxu0
        %v1682 = vadd.f32 0.0, %v1681
        %v1683 = vpop.f32.mrb[0].mxu0
        %v1684 = vpop.f32.mrb[0].mxu0
        %v1685 = vpop.f32.mrb[0].mxu0
        %1686 = vdwg.mxu0
        %v1688 = vsel %vm1361, %v1592, 0
        %v1691 = vsel %vm1597, %v1350, 0
        %1693 = vmatprep.subr.bf16.mxu0 0
        %1694 = vmatpush1.bf16.msra.mxu0 %v1691
        %1695 = vmatprep.subr.bf16.mxu0 0
        %1696 = vmatpush1.bf16.msra.mxu0 0
        %1697 = vmatprep.subr.bf16.mxu0 0
        %1698 = vmatpush1.bf16.msra.mxu0 0
        %1699 = vmatprep.subr.bf16.mxu0 0
        %1700 = vmatpush1.bf16.msra.mxu0 0
        %1701 = vmatprep.subr.bf16.mxu0 0
        %1702 = vmatpush1.bf16.msra.mxu0 0
        %1703 = vmatprep.subr.bf16.mxu0 0
        %1704 = vmatpush1.bf16.msra.mxu0 0
        %1705 = vmatprep.subr.bf16.mxu0 0
        %1706 = vmatpush1.bf16.msra.mxu0 0
        %1707 = vmatprep.subr.bf16.mxu0 0
        %1708 = vmatpush1.bf16.msra.mxu0 0
        %1709 = vmatprep.subr.bf16.mxu0 0
        %1710 = vmatpush1.bf16.msra.mxu0 0
        %1711 = vmatprep.subr.bf16.mxu0 0
        %1712 = vmatpush1.bf16.msra.mxu0 0
        %1713 = vmatprep.subr.bf16.mxu0 0
        %1714 = vmatpush1.bf16.msra.mxu0 0
        %1715 = vmatprep.subr.bf16.mxu0 0
        %1716 = vmatpush1.bf16.msra.mxu0 0
        %1717 = vmatprep.subr.bf16.mxu0 0
        %1718 = vmatpush1.bf16.msra.mxu0 0
        %1719 = vmatprep.subr.bf16.mxu0 0
        %1720 = vmatpush1.bf16.msra.mxu0 0
        %1721 = vmatprep.subr.bf16.mxu0 0
        %1722 = vmatpush1.bf16.msra.mxu0 0
        %1723 = vmatprep.subr.bf16.mxu0 0
        %1724 = vmatpush1.bf16.msra.mxu0 0
        %1725 = vmatprep.mubr.bf16.mxu0 0
        %1726 = vmatmul.mubr.bf16.gmra.mrb[0].mxu0 %v1688
        %v1727 = vpop.f32.mrb[0].mxu0
        %v1728 = vadd.f32 0.0, %v1727
        %v1729 = vpop.f32.mrb[0].mxu0
        %v1730 = vpop.f32.mrb[0].mxu0
        %v1731 = vpop.f32.mrb[0].mxu0
        %1732 = vdwg.mxu0
        %v1734 = vsel %vm1361, %v1593, 0
        %v1737 = vsel %vm1597, %v1351, 0
        %1739 = vmatprep.subr.bf16.mxu0 0
        %1740 = vmatpush1.bf16.msra.mxu0 %v1737
        %1741 = vmatprep.subr.bf16.mxu0 0
        %1742 = vmatpush1.bf16.msra.mxu0 0
        %1743 = vmatprep.subr.bf16.mxu0 0
        %1744 = vmatpush1.bf16.msra.mxu0 0
        %1745 = vmatprep.subr.bf16.mxu0 0
        %1746 = vmatpush1.bf16.msra.mxu0 0
        %1747 = vmatprep.subr.bf16.mxu0 0
        %1748 = vmatpush1.bf16.msra.mxu0 0
        %1749 = vmatprep.subr.bf16.mxu0 0
        %1750 = vmatpush1.bf16.msra.mxu0 0
        %1751 = vmatprep.subr.bf16.mxu0 0
        %1752 = vmatpush1.bf16.msra.mxu0 0
        %1753 = vmatprep.subr.bf16.mxu0 0
        %1754 = vmatpush1.bf16.msra.mxu0 0
        %1755 = vmatprep.subr.bf16.mxu0 0
        %1756 = vmatpush1.bf16.msra.mxu0 0
        %1757 = vmatprep.subr.bf16.mxu0 0
        %1758 = vmatpush1.bf16.msra.mxu0 0
        %1759 = vmatprep.subr.bf16.mxu0 0
        %1760 = vmatpush1.bf16.msra.mxu0 0
        %1761 = vmatprep.subr.bf16.mxu0 0
        %1762 = vmatpush1.bf16.msra.mxu0 0
        %1763 = vmatprep.subr.bf16.mxu0 0
        %1764 = vmatpush1.bf16.msra.mxu0 0
        %1765 = vmatprep.subr.bf16.mxu0 0
        %1766 = vmatpush1.bf16.msra.mxu0 0
        %1767 = vmatprep.subr.bf16.mxu0 0
        %1768 = vmatpush1.bf16.msra.mxu0 0
        %1769 = vmatprep.subr.bf16.mxu0 0
        %1770 = vmatpush1.bf16.msra.mxu0 0
        %1771 = vmatprep.mubr.bf16.mxu0 0
        %1772 = vmatmul.mubr.bf16.gmra.mrb[0].mxu0 %v1734
        %v1773 = vpop.f32.mrb[0].mxu0
        %v1774 = vadd.f32 0.0, %v1773
        %v1775 = vpop.f32.mrb[0].mxu0
        %v1776 = vpop.f32.mrb[0].mxu0
        %v1777 = vpop.f32.mrb[0].mxu0
        %1778 = vdwg.mxu0
        %v1779 = vcombine.low %v1636, %v1728
        %v1780 = vcombine.high %v1636, %v1728
        %v1782 = vunpack.c.l.s4 1983009808
        %v1783 = vunpack.c.0.s8 %v1782
        %v1784 = vlaneseq
        %v1785 = vshrl.u32 %v1784, 7
        %v1786 = vsub.s32 %v1783, %v1785
        %v1787 = vrot.slane %v1779, %v1786
        %v1789 = vunpack.c.l.s4 1983009808
        %v1790 = vunpack.c.0.s8 %v1789
        %v1791 = vlaneseq
        %v1792 = vshrl.u32 %v1791, 7
        %v1793 = vsub.s32 %v1790, %v1792
        %v1794 = vrot.slane %v1780, %v1793
        %v1795 = vcombine.low %v1682, %v1774
        %v1796 = vcombine.high %v1682, %v1774
        %v1798 = vunpack.c.l.s4 1983009808
        %v1799 = vunpack.c.0.s8 %v1798
        %v1800 = vlaneseq
        %v1801 = vshrl.u32 %v1800, 7
        %v1802 = vsub.s32 %v1799, %v1801
        %v1803 = vrot.slane %v1795, %v1802
        %v1805 = vunpack.c.l.s4 1983009808
        %v1806 = vunpack.c.0.s8 %v1805
        %v1807 = vlaneseq
        %v1808 = vshrl.u32 %v1807, 7
        %v1809 = vsub.s32 %v1806, %v1808
        %v1810 = vrot.slane %v1796, %v1809
        %v1811 = vcombine.low %v1787, %v1803
        %v1812 = vcombine.high %v1787, %v1803
        %v1814 = vunpack.c.l.s4 1934713408
        %v1815 = vunpack.c.0.s8 %v1814
        %v1816 = vlaneseq
        %v1817 = vshrl.u32 %v1816, 7
        %v1818 = vsub.s32 %v1815, %v1817
        %v1819 = vrot.slane %v1811, %v1818
        %v1821 = vunpack.c.l.s4 1934713408
        %v1822 = vunpack.c.0.s8 %v1821
        %v1823 = vlaneseq
        %v1824 = vshrl.u32 %v1823, 7
        %v1825 = vsub.s32 %v1822, %v1824
        %v1826 = vrot.slane %v1812, %v1825
        %v1827 = vcombine.low %v1794, %v1810
        %v1828 = vcombine.high %v1794, %v1810
        %v1830 = vunpack.c.l.s4 1934713408
        %v1831 = vunpack.c.0.s8 %v1830
        %v1832 = vlaneseq
        %v1833 = vshrl.u32 %v1832, 7
        %v1834 = vsub.s32 %v1831, %v1833
        %v1835 = vrot.slane %v1827, %v1834
        %v1837 = vunpack.c.l.s4 1934713408
        %v1838 = vunpack.c.0.s8 %v1837
        %v1839 = vlaneseq
        %v1840 = vshrl.u32 %v1839, 7
        %v1841 = vsub.s32 %v1838, %v1840
        %v1842 = vrot.slane %v1828, %v1841
        %v1843 = vcombine.high %v1819, 0.0
        %v1844 = vcombine.high %v1826, 0.0
        %v1845 = vcombine.high %v1835, 0.0
        %v1846 = vcombine.high %v1842, 0.0
        %v1847 = vcombine.low %v1819, %v1826
        %v1849 = vunpack.c.l.s4 1983009808
        %v1850 = vunpack.c.0.s8 %v1849
        %v1851 = vlaneseq
        %v1852 = vshrl.u32 %v1851, 7
        %v1853 = vsub.s32 %v1850, %v1852
        %v1854 = vrot.slane %v1847, %v1853
        %v1855 = vcombine.low %v1843, %v1844
        %v1857 = vunpack.c.l.s4 1983009808
        %v1858 = vunpack.c.0.s8 %v1857
        %v1859 = vlaneseq
        %v1860 = vshrl.u32 %v1859, 7
        %v1861 = vsub.s32 %v1858, %v1860
        %v1862 = vrot.slane %v1855, %v1861
        %v1863 = vcombine.low %v1835, %v1842
        %v1865 = vunpack.c.l.s4 1983009808
        %v1866 = vunpack.c.0.s8 %v1865
        %v1867 = vlaneseq
        %v1868 = vshrl.u32 %v1867, 7
        %v1869 = vsub.s32 %v1866, %v1868
        %v1870 = vrot.slane %v1863, %v1869
        %v1871 = vcombine.low %v1845, %v1846
        %v1873 = vunpack.c.l.s4 1983009808
        %v1874 = vunpack.c.0.s8 %v1873
        %v1875 = vlaneseq
        %v1876 = vshrl.u32 %v1875, 7
        %v1877 = vsub.s32 %v1874, %v1876
        %v1878 = vrot.slane %v1871, %v1877
        %v1879 = vcombine.low %v1854, %v1862
        %v1880 = vcombine.high %v1854, %v1862
        %v1882 = vunpack.c.l.s4 1934713408
        %v1883 = vunpack.c.0.s8 %v1882
        %v1884 = vlaneseq
        %v1885 = vshrl.u32 %v1884, 7
        %v1886 = vsub.s32 %v1883, %v1885
        %v1887 = vrot.slane %v1879, %v1886
        %v1889 = vunpack.c.l.s4 1934713408
        %v1890 = vunpack.c.0.s8 %v1889
        %v1891 = vlaneseq
        %v1892 = vshrl.u32 %v1891, 7
        %v1893 = vsub.s32 %v1890, %v1892
        %v1894 = vrot.slane %v1880, %v1893
        %v1895 = vcombine.low %v1870, %v1878
        %v1896 = vcombine.high %v1870, %v1878
        %v1898 = vunpack.c.l.s4 1934713408
        %v1899 = vunpack.c.0.s8 %v1898
        %v1900 = vlaneseq
        %v1901 = vshrl.u32 %v1900, 7
        %v1902 = vsub.s32 %v1899, %v1901
        %v1903 = vrot.slane %v1895, %v1902
        %v1905 = vunpack.c.l.s4 1934713408
        %v1906 = vunpack.c.0.s8 %v1905
        %v1907 = vlaneseq
        %v1908 = vshrl.u32 %v1907, 7
        %v1909 = vsub.s32 %v1906, %v1908
        %v1910 = vrot.slane %v1896, %v1909
        %v1911 = vcombine.low %v1887, %v1903
        %v1912 = vcombine.high %v1887, %v1903
        %v1913 = vcombine.low %v1894, %v1910
        %v1914 = vcombine.high %v1894, %v1910
        %1916 = vrot.lane.b32.xlu0 %v1912, 8
        %v1917 = vpop.permute.xlu0 %1916
        %1920 = vrot.lane.b32.xlu0 %v1913, 16
        %v1921 = vpop.permute.xlu0 %1920
        %1924 = vrot.lane.b32.xlu0 %v1914, 24
        %v1925 = vpop.permute.xlu0 %1924
        %v1927 = vsel %vm1361, %v1911, %v1917
        %vm1928 = vcmask 130048
        %v1929 = vsel %vm1928, %v1927, %v1921
        %vm1930 = vcmask 195584
        %v1931 = vsel %vm1930, %v1929, %v1925
        %v1932 = vpack.c.bf16 %v1931, %v1931
        %v1933 = vld [vmem:[#allocation19] sm:$0xf]
        %v1934 = vld [vmem:[#allocation19 + $0x4] sm:$0xf]
        %v1935 = vld [vmem:[#allocation19 + $0x8] sm:$0xf]
        %v1936 = vld [vmem:[#allocation19 + $0xc] sm:$0xf]
        %v1937 = vld [vmem:[#allocation20] sm:$0x1]
        %v1939 = vlaneseq
        %v1940 = vshrl.u32 %v1939, 7
        %v1941 = vsub.s32 0, %v1940
        %v1942 = vrot.slane %v1937, %v1941
        %v1948 = vunpack.c.l.b16 %v1933
        %v1949 = vunpack.c.l.b16 %v1934
        %v1950 = vunpack.c.l.b16 %v1935
        %v1951 = vunpack.c.l.b16 %v1936
        %v1952 = vpack.c.b16 %v1949, %v1948
        %v1953 = vpack.c.b16 %v1951, %v1950
        %v1957 = vsel %vm679, %v1932, 0
        %1959 = vmatprep.subr.bf16.mxu0 0
        %1960 = vmatpush1.bf16.msra.mxu0 %v1952
        %1961 = vmatprep.subr.bf16.mxu0 0
        %1962 = vmatpush1.bf16.msra.mxu0 %v1953
        %1963 = vmatprep.subr.bf16.mxu0 0
        %1964 = vmatpush1.bf16.msra.mxu0 0
        %1965 = vmatprep.subr.bf16.mxu0 0
        %1966 = vmatpush1.bf16.msra.mxu0 0
        %1967 = vmatprep.subr.bf16.mxu0 0
        %1968 = vmatpush1.bf16.msra.mxu0 0
        %1969 = vmatprep.subr.bf16.mxu0 0
        %1970 = vmatpush1.bf16.msra.mxu0 0
        %1971 = vmatprep.subr.bf16.mxu0 0
        %1972 = vmatpush1.bf16.msra.mxu0 0
        %1973 = vmatprep.subr.bf16.mxu0 0
        %1974 = vmatpush1.bf16.msra.mxu0 0
        %1975 = vmatprep.subr.bf16.mxu0 0
        %1976 = vmatpush1.bf16.msra.mxu0 0
        %1977 = vmatprep.subr.bf16.mxu0 0
        %1978 = vmatpush1.bf16.msra.mxu0 0
        %1979 = vmatprep.subr.bf16.mxu0 0
        %1980 = vmatpush1.bf16.msra.mxu0 0
        %1981 = vmatprep.subr.bf16.mxu0 0
        %1982 = vmatpush1.bf16.msra.mxu0 0
        %1983 = vmatprep.subr.bf16.mxu0 0
        %1984 = vmatpush1.bf16.msra.mxu0 0
        %1985 = vmatprep.subr.bf16.mxu0 0
        %1986 = vmatpush1.bf16.msra.mxu0 0
        %1987 = vmatprep.subr.bf16.mxu0 0
        %1988 = vmatpush1.bf16.msra.mxu0 0
        %1989 = vmatprep.subr.bf16.mxu0 0
        %1990 = vmatpush1.bf16.msra.mxu0 0
        %1991 = vmatprep.mubr.bf16.mxu0 0
        %1992 = vmatmul.mubr.bf16.gmra.mrb[0].mxu0 %v1957
        %v1993 = vpop.f32.mrb[0].mxu0
        %v1994 = vadd.f32 %v1942, %v1993
        %v1995 = vpop.f32.mrb[0].mxu0
        %v1996 = vpop.f32.mrb[0].mxu0
        %v1997 = vpop.f32.mrb[0].mxu0
        %1998 = vdwg.mxu0
        %v1999 = vadd.f32 %v707, %v1994
        %v2000 = vld [vmem:[#allocation22] sm:$0x1]
        %v2001 = vld [vmem:[#allocation23] sm:$0x1]
        %v2002 = vsel %vm679, %v1999, 0.0
        %2003 = vadd.xlane.f32.xlu0 %v2002
        %v2004 = vpop.xlane.xlu0 %2003
        %v2005 = vmul.f32 %v2004, %v683
        %v2006 = vsub.f32 %v1999, %v2005
        %v2007 = vmul.f32 %v2006, %v2006
        %v2008 = vsel %vm679, %v2007, 0.0
        %2009 = vadd.xlane.f32.xlu0 %v2008
        %v2010 = vpop.xlane.xlu0 %2009
        %v2011 = vmul.f32 %v2010, %v683
        %v2012 = vadd.f32 %v2011, 1e-12
        %v2013 = vrsqrt.pop %v2012
        %v2014 = vmul.f32 %v2006, %v2013
        %v2016 = vlaneseq
        %v2017 = vshrl.u32 %v2016, 7
        %v2018 = vsub.s32 0, %v2017
        %v2019 = vrot.slane %v2000, %v2018
        %v2021 = vmul.f32 %v2014, %v2019
        %v2023 = vlaneseq
        %v2024 = vshrl.u32 %v2023, 7
        %v2025 = vsub.s32 0, %v2024
        %v2026 = vrot.slane %v2001, %v2025
        %v2028 = vadd.f32 %v2021, %v2026
        %2029 = vst.msk [vmem:[%s674] sm:$0xff] %vm679, %v2028
        %s2030 = sand.u32 %s352, 1
        %s2031 = scalar_lea.sflag [#allocation4], %s2030
        %s2032 = sand.u32 %s352, 1
        %s2033 = smul.addr %s2032, 8
        %s2034 = scalar_lea.vmem [#allocation25], %s2033
        // Predicated region
        $region133: #{tpu_custom_call.1} parent=75 // pred_check
          %p2035 = pneg %p362
        $region134: #{tpu_custom_call.1} parent=75 // pred_check_branch
          %2037 = sbr.rel (%p2035) target = $region136
        $region135: #{tpu_custom_call.1} parent=75 // pred_region
          %s2039 = ssub.s32 128, 128
          %2040 = vsyncadd %s2031, %s2039
          %s2041 = smul.addr %s40, 128
          %s2042 = scalar_lea.hbm %s14, %s2041
          %s2044 = sshll.u32 %s2034, 4
          %s2045 = int_to_ptr.vmem [resolvable:$true] %s2044
          %2047 = dma.vmem_to_hbm [thread:$0]  %s2045, 128, %s2042, %s2031
        $region136: #{tpu_custom_call.1} parent=75 // pred_fallthru
          _
      $region76: #{tpu_custom_call.1} parent=5 // pred_fallthru
        _
      %p2048 = scmp.le.s32.totalorder 2, %s35
      // Predicated region
      $region137: #{tpu_custom_call.1} parent=5 // pred_check
        %p2049 = pneg %p2048
      $region138: #{tpu_custom_call.1} parent=5 // pred_check_branch
        %2051 = sbr.rel (%p2049) target = $region140
      $region139: #{tpu_custom_call.1} parent=5 // pred_region
        %s2052 = ssub.s32 %s35, 2
        // Predicated region
        $region141: #{tpu_custom_call.1} parent=139 // pred_check
          %p2053 = pneg %p368
        $region142: #{tpu_custom_call.1} parent=139 // pred_check_branch
          %2055 = sbr.rel (%p2053) target = $region144
        $region143: #{tpu_custom_call.1} parent=139 // pred_region
          %s2056 = sand.u32 %s353, 1
          %s2057 = scalar_lea.sflag [#allocation4], %s2056
          %s2058 = sand.u32 %s353, 1
          %s2059 = smul.addr %s2058, 8
          %s2060 = scalar_lea.vmem [#allocation25], %s2059
          %2061 = dma.done %s2057, 128
        $region144: #{tpu_custom_call.1} parent=139 // pred_fallthru
          _
      $region140: #{tpu_custom_call.1} parent=5 // pred_fallthru
        _
    $region6: #{tpu_custom_call.1} parent=1 // loop_footer
      %s39 = sadd.s32 1, %s35
    $region7: #{tpu_custom_call.1} parent=1 // loop_footer_branch
      %34 = sbr.rel target = $region3
    $region8: #{tpu_custom_call.1} parent=1 // loop_exit
      _
    %2062 = vsyncpa [#allocation3], 1
    %s2063 = scalar_lea.sflag [#allocation3], 1
    %2064 = vsyncpa %s2063, 1
    %2065 = vsyncpa [#allocation6], 1
    %s2066 = scalar_lea.sflag [#allocation6], 1
    %2067 = vsyncpa %s2066, 1
    %2068 = vsyncpa [#allocation9], 1
    %2069 = vsyncpa [#allocation12], 1
    %2070 = vsyncpa [#allocation15], 1
    %2071 = vsyncpa [#allocation18], 1
    %2072 = vsyncpa [#allocation21], 1
    %2073 = vsyncpa [#allocation24], 1
    %2074 = vsyncpa [#allocation4], 1
    %s2075 = scalar_lea.sflag [#allocation4], 1
    %2076 = vsyncpa %s2075, 1

</llo_original>
